<compile_context>
chip_gen: v7x
topology: tpu7x:2x2x1
jax: 0.10.0
libtpu: 0.0.40
codegen_flags: <defaults>
</compile_context>

<pallas_src>
import jax
import jax.numpy as jnp
from jax.experimental import pallas as pl
from jax.experimental.pallas import tpu as pltpu


def _round_up(x, m):
    return ((x + m - 1) // m) * m


# ---------------------------------------------------------------------------
# Kernel
# ---------------------------------------------------------------------------

def _attend(seq_ref, h_bf, wfh_ref, wfe_ref, batt_ref, v_ref):
    """One batched Bahdanau attention head (seq-major layout).

    seq_ref: (S, TB, H) f32   encoder / previous outputs for this batch tile
    h_bf:    (TB, H)   bf16   current decoder hidden state
    wfh/wfe: (H, H)    bf16   transposed projection weights
    batt:    (1, H)    f32    fused projection bias (b_fh + b_fe)
    v:       (1, H)    f32    alignment vector
    returns  (TB, H)   f32    attention context
    """
    f32 = jnp.float32
    seq = seq_ref[...]                                            # (S, TB, H) f32
    S, TB, H = seq.shape

    ph = jnp.dot(h_bf, wfh_ref[...], preferred_element_type=f32)  # (TB, H)
    pe = jnp.dot(seq.reshape(S * TB, H).astype(jnp.bfloat16),     # big MXU matmul
                 wfe_ref[...], preferred_element_type=f32).reshape(S, TB, H)
    x = jnp.tanh(pe + ph[None, :, :] + batt_ref[...])             # (S, TB, H)

    e = jnp.sum(x * v_ref[...], axis=-1, keepdims=True)           # (S, TB, 1) scores
    # NOTE: the alignment bias adds the same constant to every score -> softmax
    # invariant, so it is intentionally not applied here.
    m = jnp.max(e, axis=0, keepdims=True)                         # (1, TB, 1)
    p = jnp.exp(e - m)                                            # (S, TB, 1)
    denom = jnp.sum(p, axis=0, keepdims=True)                     # (1, TB, 1)
    w = p * pl.reciprocal(denom, approx=True)                     # (S, TB, 1)
    return jnp.sum(w * seq, axis=0)                               # (TB, H)


def _bahdanau_decoder_kernel(
    xh_ref,       # (TB, Wxh) f32 : [embedded | env_ctx | h] for this batch tile
    prev_ref,     # (S_prev, TB, H) f32   seq-major
    enc_ref,      # (S_enc,  TB, H) f32   seq-major
    h_ref,        # (TB, H) f32
    c_ref,        # (TB, H) f32
    wfh_p_ref,    # (H, H) bf16   prev-attention: hidden projection (transposed)
    wfe_p_ref,    # (H, H) bf16   prev-attention: encoder projection (transposed)
    batt_p_ref,   # (1, H) f32    fused bias b_fh_prev + b_fe_prev
    v_p_ref,      # (1, H) f32    alignment vector (prev)
    wfh_c_ref,    # (H, H) bf16   cur-attention
    wfe_c_ref,    # (H, H) bf16
    batt_c_ref,   # (1, H) f32
    v_c_ref,      # (1, H) f32
    wxh_ref,      # (Wxh, 4H) bf16  fused gate weights for [emb | env | h]
    wcp_ref,      # (H,   4H) bf16  gate weights for ctx_prev
    wcc_ref,      # (H,   4H) bf16  gate weights for ctx_cur
    bg_ref,       # (1,   4H) f32   fused gate bias (b_ih + b_hh)
    wout_ref,     # (H, O) bf16     output projection (transposed)
    bout_ref,     # (1, O) f32
    out_ref,      # (TB, P) f32     packed [logits | h_new | c_new] (128-aligned)
):
    f32 = jnp.float32
    bf16 = jnp.bfloat16
    H = h_ref.shape[-1]
    O = wout_ref.shape[-1]

    h_bf = h_ref[...].astype(bf16)

    # --- two Bahdanau attention heads --------------------------------------
    ctx_prev = _attend(prev_ref, h_bf, wfh_p_ref, wfe_p_ref, batt_p_ref, v_p_ref)
    ctx_cur = _attend(enc_ref, h_bf, wfh_c_ref, wfe_c_ref, batt_c_ref, v_c_ref)

    # --- fused LSTM gate matmul (bf16 operands, f32 accumulation) -----------
    gates = (jnp.dot(xh_ref[...].astype(bf16), wxh_ref[...], preferred_element_type=f32)
             + jnp.dot(ctx_prev.astype(bf16), wcp_ref[...], preferred_element_type=f32)
             + jnp.dot(ctx_cur.astype(bf16), wcc_ref[...], preferred_element_type=f32)
             + bg_ref[...])                                        # (TB, 4H)

    # Single EUP pass over the whole tile: sigmoid(x) = 0.5*(tanh(0.5x)+1),
    # tanh on the `g` lane block.
    lane = jax.lax.broadcasted_iota(jnp.int32, gates.shape, 1)
    is_g = (lane >= 2 * H) & (lane < 3 * H)
    t = jnp.tanh(jnp.where(is_g, gates, 0.5 * gates))
    act = jnp.where(is_g, t, 0.5 * (t + 1.0))

    i_g = act[:, 0 * H:1 * H]
    f_g = act[:, 1 * H:2 * H]
    g_g = act[:, 2 * H:3 * H]
    o_g = act[:, 3 * H:4 * H]

    c_new = f_g * c_ref[...] + i_g * g_g
    h_new = o_g * jnp.tanh(c_new)

    logits = (jnp.dot(h_new.astype(bf16), wout_ref[...], preferred_element_type=f32)
              + bout_ref[...])                                     # (TB, O)

    # --- lane-dense packed output: 128-aligned sub-blocks, one tile write ---
    off_h = _round_up(O, 128)
    off_c = off_h + _round_up(H, 128)
    out_ref[...] = jnp.zeros_like(out_ref)
    out_ref[:, 0:O] = logits
    out_ref[:, off_h:off_h + H] = h_new
    out_ref[:, off_c:off_c + H] = c_new


# ---------------------------------------------------------------------------
# Pallas wrapper
# ---------------------------------------------------------------------------

def bahdanau_decoder_step(xh, prev_sm, enc_sm, h, c,
                          wfh_p, wfe_p, batt_p, v_p,
                          wfh_c, wfe_c, batt_c, v_c,
                          w_xh, w_cp, w_cc, b_gate, w_out_t, b_out,
                          tile_b=None):
    """One fused decoder step over the whole batch.

    Returns a (B, P) packed slab with 128-aligned sub-blocks:
      [:, :O]                         = logits
      [:, round_up(O,128) : +H]       = h_new
      [:, round_up(O,128)+round_up(H,128) : +H] = c_new
    """
    B, Wxh = xh.shape
    S_prev, _, H = prev_sm.shape
    S_enc = enc_sm.shape[0]
    G = w_xh.shape[-1]                  # 4H
    O = w_out_t.shape[-1]

    off_h = _round_up(O, 128)
    off_c = off_h + _round_up(H, 128)
    P = off_c + _round_up(H, 128)

    # Batch tile: multiple of 8 sublanes; big tiles amortize per-step overhead,
    # multiple tiles shard across v7x's two TensorCores.
    if tile_b is None:
        tile_b = min(256, _round_up(B, 8))
    tile_b = max(8, _round_up(tile_b, 8))
    B_pad = _round_up(B, tile_b)
    if B_pad != B:
        pad = B_pad - B
        xh = jnp.pad(xh, ((0, pad), (0, 0)))
        h = jnp.pad(h, ((0, pad), (0, 0)))
        c = jnp.pad(c, ((0, pad), (0, 0)))
        prev_sm = jnp.pad(prev_sm, ((0, 0), (0, pad), (0, 0)))
        enc_sm = jnp.pad(enc_sm, ((0, 0), (0, pad), (0, 0)))

    grid = (B_pad // tile_b,)

    def per_tile(*shape):
        if len(shape) == 2:
            return pl.BlockSpec(shape, lambda b: (b, 0))
        return pl.BlockSpec(shape, lambda b: (0, b, 0))     # batch is the middle dim

    def resident(shape):
        nd = len(shape)
        return pl.BlockSpec(shape, lambda b: (0,) * nd)      # weights stay in VMEM

    in_specs = [
        per_tile(tile_b, Wxh),                   # xh
        per_tile(S_prev, tile_b, H),             # previous_outputs (seq-major)
        per_tile(S_enc, tile_b, H),              # encoder_outputs  (seq-major)
        per_tile(tile_b, H),                     # h
        per_tile(tile_b, H),                     # c
        resident((H, H)), resident((H, H)), resident((1, H)), resident((1, H)),
        resident((H, H)), resident((H, H)), resident((1, H)), resident((1, H)),
        resident((Wxh, G)), resident((H, G)), resident((H, G)), resident((1, G)),
        resident((H, O)), resident((1, O)),
    ]

    # Advisory cost estimate so XLA overlaps the glue ops (gather/concat).
    flops = 2 * B_pad * (2 * H * H + (S_prev + S_enc) * H * H
                         + 2 * (S_prev + S_enc) * H
                         + Wxh * G + 2 * H * G + H * O)
    transcendentals = B_pad * ((S_prev + S_enc) * (H + 1) + G + H)
    bytes_acts = 4 * B_pad * (Wxh + (S_prev + S_enc) * H + 2 * H + P)
    bytes_wts = 2 * (4 * H * H + Wxh * G + 2 * H * G + H * O) + 4 * (6 * H + G + O)
    cost = pl.CostEstimate(flops=int(flops),
                           transcendentals=int(transcendentals),
                           bytes_accessed=int(bytes_acts + bytes_wts))

    out = pl.pallas_call(
        _bahdanau_decoder_kernel,
        out_shape=jax.ShapeDtypeStruct((B_pad, P), jnp.float32),
        grid=grid,
        in_specs=in_specs,
        out_specs=pl.BlockSpec((tile_b, P), lambda b: (b, 0)),
        compiler_params=pltpu.CompilerParams(
            dimension_semantics=("parallel",),
            vmem_limit_bytes=64 * 1024 * 1024,
        ),
        cost_estimate=cost,
    )(xh, prev_sm, enc_sm, h, c,
      wfh_p, wfe_p, batt_p, v_p,
      wfh_c, wfe_c, batt_c, v_c,
      w_xh, w_cp, w_cc, b_gate, w_out_t, b_out)

    return out[:B]                                   # (B, P)


# ---------------------------------------------------------------------------
# Module (deterministic parameters + forward matching the PyTorch module)
# ---------------------------------------------------------------------------

def _bf16_round(x):
    """Round a master f32 weight to bf16 precision (kernel stores it as bf16)."""
    return x.astype(jnp.bfloat16).astype(jnp.float32)


class Part4BahdanauAttentionDecoderPallas:
    def __init__(self, embedding_size, environment_context_size, hidden_size,
                 output_size, key):
        self.embedding_size = E = embedding_size
        self.environment_context_size = environment_context_size
        self.hidden_size = H = hidden_size
        self.output_size = O = output_size
        env7 = environment_context_size * 7
        D = E + H + H + env7          # LSTM input size (torch order: emb, prev_ctx, cur_ctx, env)
        self.lstm_input_size = D

        ks = jax.random.split(key, 19)
        scale = 0.1

        def normal(k, shape):
            return scale * jax.random.normal(k, shape, jnp.float32)

        # Embedding (padding_idx=0 -> row 0 is zero).
        self.embedding = normal(ks[0], (O, E)).at[0].set(0.0)

        # "cur" attention head (over encoder_outputs).
        self.w_fh_cur = _bf16_round(normal(ks[1], (H, H)))
        self.b_fh_cur = normal(ks[2], (H,))
        self.w_fe_cur = _bf16_round(normal(ks[3], (H, H)))
        self.b_fe_cur = normal(ks[4], (H,))
        self.w_al_cur = normal(ks[5], (1, H))
        self.b_al_cur = normal(ks[6], (1,))

        # "prev" attention head (over previous_outputs).
        self.w_fh_prev = _bf16_round(normal(ks[7], (H, H)))
        self.b_fh_prev = normal(ks[8], (H,))
        self.w_fe_prev = _bf16_round(normal(ks[9], (H, H)))
        self.b_fe_prev = normal(ks[10], (H,))
        self.w_al_prev = normal(ks[11], (1, H))
        self.b_al_prev = normal(ks[12], (1,))

        # NOTE: the PyTorch module also defines attn_combine_cur/prev, but its
        # forward never uses them, so they are omitted here.

        # LSTM (PyTorch convention: gates i,f,g,o; input order emb,prev,cur,env).
        self.w_ih = _bf16_round(normal(ks[13], (4 * H, D)))
        self.w_hh = _bf16_round(normal(ks[14], (4 * H, H)))
        self.b_ih = normal(ks[15], (4 * H,))
        self.b_hh = normal(ks[16], (4 * H,))

        # Output projection.
        self.w_out = _bf16_round(normal(ks[17], (O, H)))
        self.b_out = normal(ks[18], (O,))

        # ---- kernel-facing, pre-transposed / fused / bf16 views ------------
        wih_t = self.w_ih.T                       # (D, 4H)
        whh_t = self.w_hh.T                       # (H, 4H)
        w_emb = wih_t[0:E]                        # rows for embedded input
        w_prev = wih_t[E:E + H]                   # rows for prev-attention ctx
        w_cur = wih_t[E + H:E + 2 * H]            # rows for cur-attention ctx
        w_env = wih_t[E + 2 * H:]                 # rows for env context

        # kernel xh lane order: [emb | env | h]
        self._w_xh = jnp.concatenate([w_emb, w_env, whh_t], axis=0).astype(jnp.bfloat16)
        self._w_cp = w_prev.astype(jnp.bfloat16)
        self._w_cc = w_cur.astype(jnp.bfloat16)
        self._b_gate = (self.b_ih + self.b_hh)[None, :]

        self._w_out_t = self.w_out.T.astype(jnp.bfloat16)      # (H, O)
        self._b_out = self.b_out[None, :]                      # (1, O)

        self._wfh_p = self.w_fh_prev.T.astype(jnp.bfloat16)
        self._wfe_p = self.w_fe_prev.T.astype(jnp.bfloat16)
        self._batt_p = (self.b_fh_prev + self.b_fe_prev)[None, :]
        self._v_p = self.w_al_prev                              # (1, H) f32

        self._wfh_c = self.w_fh_cur.T.astype(jnp.bfloat16)
        self._wfe_c = self.w_fe_cur.T.astype(jnp.bfloat16)
        self._batt_c = (self.b_fh_cur + self.b_fe_cur)[None, :]
        self._v_c = self.w_al_cur                               # (1, H) f32
        # Alignment biases shift every softmax score equally -> no kernel plumbing.

    def init_hidden(self, batch_size):
        h = jnp.zeros((1, batch_size, self.hidden_size), jnp.float32)
        c = jnp.zeros((1, batch_size, self.hidden_size), jnp.float32)
        return (h, c)

    def forward(self, input_ids, previous_outputs, encoder_outputs,
                environment_context, hidden):
        # input_ids:            (B,)            int32 token ids
        # previous_outputs:     (S_prev, B, H)  seq-major (torch convention)
        # encoder_outputs:      (S_enc,  B, H)  seq-major
        # environment_context:  (B, env_size*7)
        # hidden:               (h, c), each (1, B, H)
        h0, c0 = hidden
        h = h0[0].astype(jnp.float32)                           # (B, H)
        c = c0[0].astype(jnp.float32)                           # (B, H)

        emb = jnp.take(self.embedding, input_ids, axis=0)       # glue gather (B, E)
        xh = jnp.concatenate(
            [emb, environment_context.astype(jnp.float32), h], axis=-1)   # (B, Wxh)

        slab = bahdanau_decoder_step(
            xh,
            previous_outputs.astype(jnp.float32),               # seq-major, no transpose
            encoder_outputs.astype(jnp.float32),
            h, c,
            self._wfh_p, self._wfe_p, self._batt_p, self._v_p,
            self._wfh_c, self._wfe_c, self._batt_c, self._v_c,
            self._w_xh, self._w_cp, self._w_cc, self._b_gate,
            self._w_out_t, self._b_out)

        O, H = self.output_size, self.hidden_size
        off_h = _round_up(O, 128)
        off_c = off_h + _round_up(H, 128)
        logits = slab[:, :O]
        h_new = slab[:, off_h:off_h + H]
        c_new = slab[:, off_c:off_c + H]
        # Match PyTorch: output (1, B, O), hidden tuple of (1, B, H)
        return logits[None], (h_new[None], c_new[None])


# ---------------------------------------------------------------------------
# Pure-JAX reference (mirrors the PyTorch forward line-by-line)
# ---------------------------------------------------------------------------

def _reference_forward(dec, input_ids, previous_outputs, encoder_outputs,
                       environment_context, hidden):
    h = hidden[0][0]                                            # (B, H)
    c = hidden[1][0]
    emb = jnp.take(dec.embedding, input_ids, axis=0)            # (B, E)

    def attend(seq, w_fh, b_fh, w_fe, b_fe, w_al, b_al):
        # seq: (S, B, H) seq-major
        x = jnp.tanh((h @ w_fh.T + b_fh)[None, :, :] + (seq @ w_fe.T + b_fe))
        x = jnp.transpose(x, (1, 0, 2))                         # (B, S, H)
        scores = jnp.squeeze(x @ w_al.T, axis=2) + b_al[0]      # (B, S)
        weights = jax.nn.softmax(scores, axis=1)                # (B, S)
        seq_bm = jnp.transpose(seq, (1, 0, 2))                  # (B, S, H)
        return jnp.einsum('bs,bsh->bh', weights, seq_bm)        # (B, H)

    ctx_prev = attend(previous_outputs, dec.w_fh_prev, dec.b_fh_prev,
                      dec.w_fe_prev, dec.b_fe_prev, dec.w_al_prev, dec.b_al_prev)
    ctx_cur = attend(encoder_outputs, dec.w_fh_cur, dec.b_fh_cur,
                     dec.w_fe_cur, dec.b_fe_cur, dec.w_al_cur, dec.b_al_cur)

    x = jnp.concatenate([emb, ctx_prev, ctx_cur, environment_context], axis=-1)
    gates = x @ dec.w_ih.T + dec.b_ih + h @ dec.w_hh.T + dec.b_hh
    H = dec.hidden_size
    i = jax.nn.sigmoid(gates[:, 0 * H:1 * H])
    f = jax.nn.sigmoid(gates[:, 1 * H:2 * H])
    g = jnp.tanh(gates[:, 2 * H:3 * H])
    o = jax.nn.sigmoid(gates[:, 3 * H:4 * H])
    c_new = f * c + i * g
    h_new = o * jnp.tanh(c_new)
    logits = h_new @ dec.w_out.T + dec.b_out
    return logits[None], (h_new[None], c_new[None])


# ---------------------------------------------------------------------------
# Test driver
# ---------------------------------------------------------------------------

if __name__ == "__main__":
    key = jax.random.PRNGKey(0)
    k_param, k_prev, k_enc, k_env, k_tok, k_h, k_c = jax.random.split(key, 7)

    embedding_size = 16
    environment_context_size = 8       # concatenated env context -> 8 * 7 = 56
    hidden_size = 32
    output_size = 20
    batch = 2
    s_prev = 6
    s_enc = 10

    dec = Part4BahdanauAttentionDecoderPallas(
        embedding_size, environment_context_size, hidden_size, output_size, k_param)

    input_ids = jax.random.randint(k_tok, (batch,), 0, output_size, dtype=jnp.int32)
    previous_outputs = jax.random.normal(k_prev, (s_prev, batch, hidden_size), jnp.float32)
    encoder_outputs = jax.random.normal(k_enc, (s_enc, batch, hidden_size), jnp.float32)
    env_ctx = jax.random.normal(k_env, (batch, environment_context_size * 7), jnp.float32)
    hidden = (0.5 * jax.random.normal(k_h, (1, batch, hidden_size), jnp.float32),
              0.5 * jax.random.normal(k_c, (1, batch, hidden_size), jnp.float32))

    fwd = jax.jit(dec.forward)
    out, (h_new, c_new) = fwd(input_ids, previous_outputs, encoder_outputs, env_ctx, hidden)
    jax.block_until_ready((out, h_new, c_new))

    # Sanity-check against the pure-JAX f32 reference of the same math.
    ref_out, (ref_h, ref_c) = _reference_forward(
        dec, input_ids, previous_outputs, encoder_outputs, env_ctx, hidden)

    assert out.shape == (1, batch, output_size)
    assert h_new.shape == (1, batch, hidden_size)
    assert c_new.shape == (1, batch, hidden_size)
    assert bool(jnp.all(jnp.isfinite(out)))
    assert bool(jnp.all(jnp.isfinite(h_new)))
    assert bool(jnp.all(jnp.isfinite(c_new)))

    # The kernel feeds bf16 operands to the MXU (f32 accumulation), so small
    # deviations vs the f32 reference are expected; check max and mean error.
    def _check(name, a, b, max_tol=5e-2, mean_tol=5e-3):
        err = jnp.abs(a - b)
        mx = float(jnp.max(err))
        mn = float(jnp.mean(err))
        assert mx < max_tol, f"{name}: max abs err {mx} >= {max_tol}"
        assert mn < mean_tol, f"{name}: mean abs err {mn} >= {mean_tol}"

    _check("logits", out, ref_out)
    _check("h_new", h_new, ref_h)
    _check("c_new", c_new, ref_c)

    print("KERNEL_OK")
</pallas_src>

<mosaic_0001>
module attributes {stable_mosaic.version = 11 : i64} {
  func.func @_bahdanau_decoder_kernel(%arg0: i32, %arg1: memref<8x104xf32, #tpu.memory_space<vmem>>, %arg2: memref<6x8x32xf32, #tpu.memory_space<vmem>>, %arg3: memref<10x8x32xf32, #tpu.memory_space<vmem>>, %arg4: memref<8x32xf32, #tpu.memory_space<vmem>>, %arg5: memref<8x32xf32, #tpu.memory_space<vmem>>, %arg6: memref<32x32xbf16, #tpu.memory_space<vmem>>, %arg7: memref<32x32xbf16, #tpu.memory_space<vmem>>, %arg8: memref<1x32xf32, #tpu.memory_space<vmem>>, %arg9: memref<1x32xf32, #tpu.memory_space<vmem>>, %arg10: memref<32x32xbf16, #tpu.memory_space<vmem>>, %arg11: memref<32x32xbf16, #tpu.memory_space<vmem>>, %arg12: memref<1x32xf32, #tpu.memory_space<vmem>>, %arg13: memref<1x32xf32, #tpu.memory_space<vmem>>, %arg14: memref<104x128xbf16, #tpu.memory_space<vmem>>, %arg15: memref<32x128xbf16, #tpu.memory_space<vmem>>, %arg16: memref<32x128xbf16, #tpu.memory_space<vmem>>, %arg17: memref<1x128xf32, #tpu.memory_space<vmem>>, %arg18: memref<32x20xbf16, #tpu.memory_space<vmem>>, %arg19: memref<1x20xf32, #tpu.memory_space<vmem>>, %arg20: memref<8x384xf32, #tpu.memory_space<vmem>>) attributes {dimension_semantics = [#tpu.dimension_semantics<parallel>], iteration_bounds = array<i64: 1>, scalar_prefetch = 0 : i64, scratch_operands = 0 : i64, tpu.core_type = #tpu.core_type<tc>, window_params = [{transform_indices = @transform_0, window_bounds = array<i64: 8, 104>}, {transform_indices = @transform_1, window_bounds = array<i64: 6, 8, 32>}, {transform_indices = @transform_2, window_bounds = array<i64: 10, 8, 32>}, {transform_indices = @transform_3, window_bounds = array<i64: 8, 32>}, {transform_indices = @transform_4, window_bounds = array<i64: 8, 32>}, {pipeline_mode = #tpu.pipeline_mode<synchronous>, transform_indices = @transform_5, window_bounds = array<i64: 32, 32>}, {pipeline_mode = #tpu.pipeline_mode<synchronous>, transform_indices = @transform_6, window_bounds = array<i64: 32, 32>}, {pipeline_mode = #tpu.pipeline_mode<synchronous>, transform_indices = @transform_7, window_bounds = array<i64: 1, 32>}, {pipeline_mode = #tpu.pipeline_mode<synchronous>, transform_indices = @transform_8, window_bounds = array<i64: 1, 32>}, {pipeline_mode = #tpu.pipeline_mode<synchronous>, transform_indices = @transform_9, window_bounds = array<i64: 32, 32>}, {pipeline_mode = #tpu.pipeline_mode<synchronous>, transform_indices = @transform_10, window_bounds = array<i64: 32, 32>}, {pipeline_mode = #tpu.pipeline_mode<synchronous>, transform_indices = @transform_11, window_bounds = array<i64: 1, 32>}, {pipeline_mode = #tpu.pipeline_mode<synchronous>, transform_indices = @transform_12, window_bounds = array<i64: 1, 32>}, {pipeline_mode = #tpu.pipeline_mode<synchronous>, transform_indices = @transform_13, window_bounds = array<i64: 104, 128>}, {pipeline_mode = #tpu.pipeline_mode<synchronous>, transform_indices = @transform_14, window_bounds = array<i64: 32, 128>}, {pipeline_mode = #tpu.pipeline_mode<synchronous>, transform_indices = @transform_15, window_bounds = array<i64: 32, 128>}, {pipeline_mode = #tpu.pipeline_mode<synchronous>, transform_indices = @transform_16, window_bounds = array<i64: 1, 128>}, {pipeline_mode = #tpu.pipeline_mode<synchronous>, transform_indices = @transform_17, window_bounds = array<i64: 32, 20>}, {pipeline_mode = #tpu.pipeline_mode<synchronous>, transform_indices = @transform_18, window_bounds = array<i64: 1, 20>}, {transform_indices = @transform_19, window_bounds = array<i64: 8, 384>}]} {
    %c0 = arith.constant 0 : index
    %c0_0 = arith.constant 0 : index
    %0 = vector.load %arg4[%c0, %c0_0] : memref<8x32xf32, #tpu.memory_space<vmem>>, vector<8x32xf32>
    %1 = arith.truncf %0 : vector<8x32xf32> to vector<8x32xbf16>
    %c0_1 = arith.constant 0 : index
    %c0_2 = arith.constant 0 : index
    %c0_3 = arith.constant 0 : index
    %2 = vector.load %arg2[%c0_1, %c0_2, %c0_3] : memref<6x8x32xf32, #tpu.memory_space<vmem>>, vector<6x8x32xf32>
    %c0_4 = arith.constant 0 : index
    %c0_5 = arith.constant 0 : index
    %3 = vector.load %arg6[%c0_4, %c0_5] : memref<32x32xbf16, #tpu.memory_space<vmem>>, vector<32x32xbf16>
    %cst = arith.constant dense<0.000000e+00> : vector<8x32xf32>
    %4 = tpu.matmul %1, %3, %cst {dimension_numbers = #tpu.dot_dimension_numbers<[1], [0], [0], [1], [0, 0, 1, 1], [], []>} : vector<8x32xbf16>, vector<32x32xbf16>, vector<8x32xf32> -> vector<8x32xf32>
    %5 = vector.shape_cast %2 : vector<6x8x32xf32> to vector<48x32xf32>
    %6 = arith.truncf %5 : vector<48x32xf32> to vector<48x32xbf16>
    %c0_6 = arith.constant 0 : index
    %c0_7 = arith.constant 0 : index
    %7 = vector.load %arg7[%c0_6, %c0_7] : memref<32x32xbf16, #tpu.memory_space<vmem>>, vector<32x32xbf16>
    %cst_8 = arith.constant dense<0.000000e+00> : vector<48x32xf32>
    %8 = tpu.matmul %6, %7, %cst_8 {dimension_numbers = #tpu.dot_dimension_numbers<[1], [0], [0], [1], [0, 0, 1, 1], [], []>} : vector<48x32xbf16>, vector<32x32xbf16>, vector<48x32xf32> -> vector<48x32xf32>
    %9 = vector.shape_cast %8 : vector<48x32xf32> to vector<6x8x32xf32>
    %10 = vector.shape_cast %4 : vector<8x32xf32> to vector<1x8x32xf32>
    %11 = vector.broadcast %10 : vector<1x8x32xf32> to vector<6x8x32xf32>
    %12 = arith.addf %9, %11 : vector<6x8x32xf32>
    %c0_9 = arith.constant 0 : index
    %c0_10 = arith.constant 0 : index
    %13 = vector.load %arg8[%c0_9, %c0_10] : memref<1x32xf32, #tpu.memory_space<vmem>>, vector<1x32xf32>
    %14 = vector.shape_cast %13 : vector<1x32xf32> to vector<1x1x32xf32>
    %15 = vector.broadcast %14 : vector<1x1x32xf32> to vector<6x8x32xf32>
    %16 = arith.addf %12, %15 : vector<6x8x32xf32>
    %17 = math.tanh %16 : vector<6x8x32xf32>
    %c0_11 = arith.constant 0 : index
    %c0_12 = arith.constant 0 : index
    %18 = vector.load %arg9[%c0_11, %c0_12] : memref<1x32xf32, #tpu.memory_space<vmem>>, vector<1x32xf32>
    %19 = vector.shape_cast %18 : vector<1x32xf32> to vector<1x1x32xf32>
    %20 = vector.broadcast %19 : vector<1x1x32xf32> to vector<6x8x32xf32>
    %21 = arith.mulf %17, %20 : vector<6x8x32xf32>
    %cst_13 = arith.constant dense<0.000000e+00> : vector<6x8xf32>
    %22 = vector.multi_reduction <add>, %21, %cst_13 [2] : vector<6x8x32xf32> to vector<6x8xf32>
    %23 = vector.shape_cast %22 : vector<6x8xf32> to vector<6x8x1xf32>
    %cst_14 = arith.constant dense<0xFF800000> : vector<8x1xf32>
    %24 = vector.multi_reduction <maximumf>, %23, %cst_14 [0] : vector<6x8x1xf32> to vector<8x1xf32>
    %25 = vector.shape_cast %24 : vector<8x1xf32> to vector<1x8x1xf32>
    %26 = vector.broadcast %25 : vector<1x8x1xf32> to vector<6x8x1xf32>
    %27 = arith.subf %23, %26 : vector<6x8x1xf32>
    %28 = math.exp %27 : vector<6x8x1xf32>
    %cst_15 = arith.constant dense<0.000000e+00> : vector<8x1xf32>
    %29 = vector.multi_reduction <add>, %28, %cst_15 [0] : vector<6x8x1xf32> to vector<8x1xf32>
    %30 = vector.shape_cast %29 : vector<8x1xf32> to vector<1x8x1xf32>
    %31 = tpu.reciprocal %30 {approx = true} : vector<1x8x1xf32> -> vector<1x8x1xf32>
    %32 = vector.broadcast %31 : vector<1x8x1xf32> to vector<6x8x1xf32>
    %33 = arith.mulf %28, %32 : vector<6x8x1xf32>
    %34 = vector.broadcast %33 : vector<6x8x1xf32> to vector<6x8x32xf32>
    %35 = arith.mulf %34, %2 : vector<6x8x32xf32>
    %cst_16 = arith.constant dense<0.000000e+00> : vector<8x32xf32>
    %36 = vector.multi_reduction <add>, %35, %cst_16 [0] : vector<6x8x32xf32> to vector<8x32xf32>
    %c0_17 = arith.constant 0 : index
    %c0_18 = arith.constant 0 : index
    %c0_19 = arith.constant 0 : index
    %37 = vector.load %arg3[%c0_17, %c0_18, %c0_19] : memref<10x8x32xf32, #tpu.memory_space<vmem>>, vector<10x8x32xf32>
    %c0_20 = arith.constant 0 : index
    %c0_21 = arith.constant 0 : index
    %38 = vector.load %arg10[%c0_20, %c0_21] : memref<32x32xbf16, #tpu.memory_space<vmem>>, vector<32x32xbf16>
    %cst_22 = arith.constant dense<0.000000e+00> : vector<8x32xf32>
    %39 = tpu.matmul %1, %38, %cst_22 {dimension_numbers = #tpu.dot_dimension_numbers<[1], [0], [0], [1], [0, 0, 1, 1], [], []>} : vector<8x32xbf16>, vector<32x32xbf16>, vector<8x32xf32> -> vector<8x32xf32>
    %40 = vector.shape_cast %37 : vector<10x8x32xf32> to vector<80x32xf32>
    %41 = arith.truncf %40 : vector<80x32xf32> to vector<80x32xbf16>
    %c0_23 = arith.constant 0 : index
    %c0_24 = arith.constant 0 : index
    %42 = vector.load %arg11[%c0_23, %c0_24] : memref<32x32xbf16, #tpu.memory_space<vmem>>, vector<32x32xbf16>
    %cst_25 = arith.constant dense<0.000000e+00> : vector<80x32xf32>
    %43 = tpu.matmul %41, %42, %cst_25 {dimension_numbers = #tpu.dot_dimension_numbers<[1], [0], [0], [1], [0, 0, 1, 1], [], []>} : vector<80x32xbf16>, vector<32x32xbf16>, vector<80x32xf32> -> vector<80x32xf32>
    %44 = vector.shape_cast %43 : vector<80x32xf32> to vector<10x8x32xf32>
    %45 = vector.shape_cast %39 : vector<8x32xf32> to vector<1x8x32xf32>
    %46 = vector.broadcast %45 : vector<1x8x32xf32> to vector<10x8x32xf32>
    %47 = arith.addf %44, %46 : vector<10x8x32xf32>
    %c0_26 = arith.constant 0 : index
    %c0_27 = arith.constant 0 : index
    %48 = vector.load %arg12[%c0_26, %c0_27] : memref<1x32xf32, #tpu.memory_space<vmem>>, vector<1x32xf32>
    %49 = vector.shape_cast %48 : vector<1x32xf32> to vector<1x1x32xf32>
    %50 = vector.broadcast %49 : vector<1x1x32xf32> to vector<10x8x32xf32>
    %51 = arith.addf %47, %50 : vector<10x8x32xf32>
    %52 = math.tanh %51 : vector<10x8x32xf32>
    %c0_28 = arith.constant 0 : index
    %c0_29 = arith.constant 0 : index
    %53 = vector.load %arg13[%c0_28, %c0_29] : memref<1x32xf32, #tpu.memory_space<vmem>>, vector<1x32xf32>
    %54 = vector.shape_cast %53 : vector<1x32xf32> to vector<1x1x32xf32>
    %55 = vector.broadcast %54 : vector<1x1x32xf32> to vector<10x8x32xf32>
    %56 = arith.mulf %52, %55 : vector<10x8x32xf32>
    %cst_30 = arith.constant dense<0.000000e+00> : vector<10x8xf32>
    %57 = vector.multi_reduction <add>, %56, %cst_30 [2] : vector<10x8x32xf32> to vector<10x8xf32>
    %58 = vector.shape_cast %57 : vector<10x8xf32> to vector<10x8x1xf32>
    %cst_31 = arith.constant dense<0xFF800000> : vector<8x1xf32>
    %59 = vector.multi_reduction <maximumf>, %58, %cst_31 [0] : vector<10x8x1xf32> to vector<8x1xf32>
    %60 = vector.shape_cast %59 : vector<8x1xf32> to vector<1x8x1xf32>
    %61 = vector.broadcast %60 : vector<1x8x1xf32> to vector<10x8x1xf32>
    %62 = arith.subf %58, %61 : vector<10x8x1xf32>
    %63 = math.exp %62 : vector<10x8x1xf32>
    %cst_32 = arith.constant dense<0.000000e+00> : vector<8x1xf32>
    %64 = vector.multi_reduction <add>, %63, %cst_32 [0] : vector<10x8x1xf32> to vector<8x1xf32>
    %65 = vector.shape_cast %64 : vector<8x1xf32> to vector<1x8x1xf32>
    %66 = tpu.reciprocal %65 {approx = true} : vector<1x8x1xf32> -> vector<1x8x1xf32>
    %67 = vector.broadcast %66 : vector<1x8x1xf32> to vector<10x8x1xf32>
    %68 = arith.mulf %63, %67 : vector<10x8x1xf32>
    %69 = vector.broadcast %68 : vector<10x8x1xf32> to vector<10x8x32xf32>
    %70 = arith.mulf %69, %37 : vector<10x8x32xf32>
    %cst_33 = arith.constant dense<0.000000e+00> : vector<8x32xf32>
    %71 = vector.multi_reduction <add>, %70, %cst_33 [0] : vector<10x8x32xf32> to vector<8x32xf32>
    %c0_34 = arith.constant 0 : index
    %c0_35 = arith.constant 0 : index
    %72 = vector.load %arg1[%c0_34, %c0_35] : memref<8x104xf32, #tpu.memory_space<vmem>>, vector<8x104xf32>
    %73 = arith.truncf %72 : vector<8x104xf32> to vector<8x104xbf16>
    %c0_36 = arith.constant 0 : index
    %c0_37 = arith.constant 0 : index
    %74 = vector.load %arg14[%c0_36, %c0_37] : memref<104x128xbf16, #tpu.memory_space<vmem>>, vector<104x128xbf16>
    %cst_38 = arith.constant dense<0.000000e+00> : vector<8x128xf32>
    %75 = tpu.matmul %73, %74, %cst_38 {dimension_numbers = #tpu.dot_dimension_numbers<[1], [0], [0], [1], [0, 0, 1, 1], [], []>} : vector<8x104xbf16>, vector<104x128xbf16>, vector<8x128xf32> -> vector<8x128xf32>
    %76 = arith.truncf %36 : vector<8x32xf32> to vector<8x32xbf16>
    %c0_39 = arith.constant 0 : index
    %c0_40 = arith.constant 0 : index
    %77 = vector.load %arg15[%c0_39, %c0_40] : memref<32x128xbf16, #tpu.memory_space<vmem>>, vector<32x128xbf16>
    %cst_41 = arith.constant dense<0.000000e+00> : vector<8x128xf32>
    %78 = tpu.matmul %76, %77, %cst_41 {dimension_numbers = #tpu.dot_dimension_numbers<[1], [0], [0], [1], [0, 0, 1, 1], [], []>} : vector<8x32xbf16>, vector<32x128xbf16>, vector<8x128xf32> -> vector<8x128xf32>
    %79 = arith.addf %75, %78 : vector<8x128xf32>
    %80 = arith.truncf %71 : vector<8x32xf32> to vector<8x32xbf16>
    %c0_42 = arith.constant 0 : index
    %c0_43 = arith.constant 0 : index
    %81 = vector.load %arg16[%c0_42, %c0_43] : memref<32x128xbf16, #tpu.memory_space<vmem>>, vector<32x128xbf16>
    %cst_44 = arith.constant dense<0.000000e+00> : vector<8x128xf32>
    %82 = tpu.matmul %80, %81, %cst_44 {dimension_numbers = #tpu.dot_dimension_numbers<[1], [0], [0], [1], [0, 0, 1, 1], [], []>} : vector<8x32xbf16>, vector<32x128xbf16>, vector<8x128xf32> -> vector<8x128xf32>
    %83 = arith.addf %79, %82 : vector<8x128xf32>
    %c0_45 = arith.constant 0 : index
    %c0_46 = arith.constant 0 : index
    %84 = vector.load %arg17[%c0_45, %c0_46] : memref<1x128xf32, #tpu.memory_space<vmem>>, vector<1x128xf32>
    %85 = vector.broadcast %84 : vector<1x128xf32> to vector<8x128xf32>
    %86 = arith.addf %83, %85 : vector<8x128xf32>
    %87 = tpu.iota {dimensions = array<i32: 1>} : vector<8x128xi32>
    %c64_i32 = arith.constant 64 : i32
    %88 = vector.broadcast %c64_i32 : i32 to vector<8x128xi32>
    %89 = arith.cmpi sge, %87, %88 : vector<8x128xi32>
    %c96_i32 = arith.constant 96 : i32
    %90 = vector.broadcast %c96_i32 : i32 to vector<8x128xi32>
    %91 = arith.cmpi slt, %87, %90 : vector<8x128xi32>
    %92 = arith.andi %89, %91 : vector<8x128xi1>
    %cst_47 = arith.constant 5.000000e-01 : f32
    %93 = vector.broadcast %cst_47 : f32 to vector<8x128xf32>
    %94 = arith.mulf %93, %86 : vector<8x128xf32>
    %95 = arith.select %92, %86, %94 : vector<8x128xi1>, vector<8x128xf32>
    %96 = math.tanh %95 : vector<8x128xf32>
    %cst_48 = arith.constant 1.000000e+00 : f32
    %97 = vector.broadcast %cst_48 : f32 to vector<8x128xf32>
    %98 = arith.addf %96, %97 : vector<8x128xf32>
    %cst_49 = arith.constant 5.000000e-01 : f32
    %99 = vector.broadcast %cst_49 : f32 to vector<8x128xf32>
    %100 = arith.mulf %99, %98 : vector<8x128xf32>
    %101 = arith.select %92, %96, %100 : vector<8x128xi1>, vector<8x128xf32>
    %102 = vector.extract_strided_slice %101 {offsets = [0, 0], sizes = [8, 32], strides = [1, 1]} : vector<8x128xf32> to vector<8x32xf32>
    %103 = vector.extract_strided_slice %101 {offsets = [0, 32], sizes = [8, 32], strides = [1, 1]} : vector<8x128xf32> to vector<8x32xf32>
    %104 = vector.extract_strided_slice %101 {offsets = [0, 64], sizes = [8, 32], strides = [1, 1]} : vector<8x128xf32> to vector<8x32xf32>
    %105 = vector.extract_strided_slice %101 {offsets = [0, 96], sizes = [8, 32], strides = [1, 1]} : vector<8x128xf32> to vector<8x32xf32>
    %c0_50 = arith.constant 0 : index
    %c0_51 = arith.constant 0 : index
    %106 = vector.load %arg5[%c0_50, %c0_51] : memref<8x32xf32, #tpu.memory_space<vmem>>, vector<8x32xf32>
    %107 = arith.mulf %103, %106 : vector<8x32xf32>
    %108 = arith.mulf %102, %104 : vector<8x32xf32>
    %109 = arith.addf %107, %108 : vector<8x32xf32>
    %110 = math.tanh %109 : vector<8x32xf32>
    %111 = arith.mulf %105, %110 : vector<8x32xf32>
    %112 = arith.truncf %111 : vector<8x32xf32> to vector<8x32xbf16>
    %c0_52 = arith.constant 0 : index
    %c0_53 = arith.constant 0 : index
    %113 = vector.load %arg18[%c0_52, %c0_53] : memref<32x20xbf16, #tpu.memory_space<vmem>>, vector<32x20xbf16>
    %cst_54 = arith.constant dense<0.000000e+00> : vector<8x20xf32>
    %114 = tpu.matmul %112, %113, %cst_54 {dimension_numbers = #tpu.dot_dimension_numbers<[1], [0], [0], [1], [0, 0, 1, 1], [], []>} : vector<8x32xbf16>, vector<32x20xbf16>, vector<8x20xf32> -> vector<8x20xf32>
    %c0_55 = arith.constant 0 : index
    %c0_56 = arith.constant 0 : index
    %115 = vector.load %arg19[%c0_55, %c0_56] : memref<1x20xf32, #tpu.memory_space<vmem>>, vector<1x20xf32>
    %116 = vector.broadcast %115 : vector<1x20xf32> to vector<8x20xf32>
    %117 = arith.addf %114, %116 : vector<8x20xf32>
    %cst_57 = arith.constant 0.000000e+00 : f32
    %118 = vector.broadcast %cst_57 : f32 to vector<8x384xf32>
    %c0_58 = arith.constant 0 : index
    %c0_59 = arith.constant 0 : index
    %119 = vector.load %arg20[%c0_58, %c0_59] : memref<8x384xf32, #tpu.memory_space<vmem>>, vector<8x384xf32>
    tpu.vector_store %arg20[%c0_58, %c0_59], %118 {strides = array<i32>} : memref<8x384xf32, #tpu.memory_space<vmem>>, vector<8x384xf32>,
    %c0_60 = arith.constant 0 : index
    %c0_61 = arith.constant 0 : index
    %120 = vector.load %arg20[%c0_60, %c0_61] : memref<8x384xf32, #tpu.memory_space<vmem>>, vector<8x20xf32>
    tpu.vector_store %arg20[%c0_60, %c0_61], %117 {strides = array<i32>} : memref<8x384xf32, #tpu.memory_space<vmem>>, vector<8x20xf32>,
    %c0_62 = arith.constant 0 : index
    %c128 = arith.constant 128 : index
    %121 = vector.load %arg20[%c0_62, %c128] : memref<8x384xf32, #tpu.memory_space<vmem>>, vector<8x32xf32>
    tpu.vector_store %arg20[%c0_62, %c128], %111 {strides = array<i32>} : memref<8x384xf32, #tpu.memory_space<vmem>>, vector<8x32xf32>,
    %c0_63 = arith.constant 0 : index
    %c256 = arith.constant 256 : index
    %122 = vector.load %arg20[%c0_63, %c256] : memref<8x384xf32, #tpu.memory_space<vmem>>, vector<8x32xf32>
    tpu.vector_store %arg20[%c0_63, %c256], %109 {strides = array<i32>} : memref<8x384xf32, #tpu.memory_space<vmem>>, vector<8x32xf32>,
    return
  }
  func.func @transform_0(%arg0: i32) -> (i32, i32) {
    %c0_i32 = arith.constant 0 : i32
    %c0_i32_0 = arith.constant 0 : i32
    return %arg0, %c0_i32 : i32, i32
  }
  func.func @transform_1(%arg0: i32) -> (i32, i32, i32) {
    %c0_i32 = arith.constant 0 : i32
    %c0_i32_0 = arith.constant 0 : i32
    %c0_i32_1 = arith.constant 0 : i32
    return %c0_i32, %arg0, %c0_i32_0 : i32, i32, i32
  }
  func.func @transform_2(%arg0: i32) -> (i32, i32, i32) {
    %c0_i32 = arith.constant 0 : i32
    %c0_i32_0 = arith.constant 0 : i32
    %c0_i32_1 = arith.constant 0 : i32
    return %c0_i32, %arg0, %c0_i32_0 : i32, i32, i32
  }
  func.func @transform_3(%arg0: i32) -> (i32, i32) {
    %c0_i32 = arith.constant 0 : i32
    %c0_i32_0 = arith.constant 0 : i32
    return %arg0, %c0_i32 : i32, i32
  }
  func.func @transform_4(%arg0: i32) -> (i32, i32) {
    %c0_i32 = arith.constant 0 : i32
    %c0_i32_0 = arith.constant 0 : i32
    return %arg0, %c0_i32 : i32, i32
  }
  func.func @transform_5(%arg0: i32) -> (i32, i32) {
    %c0_i32 = arith.constant 0 : i32
    %c0_i32_0 = arith.constant 0 : i32
    %c0_i32_1 = arith.constant 0 : i32
    return %c0_i32, %c0_i32_0 : i32, i32
  }
  func.func @transform_6(%arg0: i32) -> (i32, i32) {
    %c0_i32 = arith.constant 0 : i32
    %c0_i32_0 = arith.constant 0 : i32
    %c0_i32_1 = arith.constant 0 : i32
    return %c0_i32, %c0_i32_0 : i32, i32
  }
  func.func @transform_7(%arg0: i32) -> (i32, i32) {
    %c0_i32 = arith.constant 0 : i32
    %c0_i32_0 = arith.constant 0 : i32
    %c0_i32_1 = arith.constant 0 : i32
    return %c0_i32, %c0_i32_0 : i32, i32
  }
  func.func @transform_8(%arg0: i32) -> (i32, i32) {
    %c0_i32 = arith.constant 0 : i32
    %c0_i32_0 = arith.constant 0 : i32
    %c0_i32_1 = arith.constant 0 : i32
    return %c0_i32, %c0_i32_0 : i32, i32
  }
  func.func @transform_9(%arg0: i32) -> (i32, i32) {
    %c0_i32 = arith.constant 0 : i32
    %c0_i32_0 = arith.constant 0 : i32
    %c0_i32_1 = arith.constant 0 : i32
    return %c0_i32, %c0_i32_0 : i32, i32
  }
  func.func @transform_10(%arg0: i32) -> (i32, i32) {
    %c0_i32 = arith.constant 0 : i32
    %c0_i32_0 = arith.constant 0 : i32
    %c0_i32_1 = arith.constant 0 : i32
    return %c0_i32, %c0_i32_0 : i32, i32
  }
  func.func @transform_11(%arg0: i32) -> (i32, i32) {
    %c0_i32 = arith.constant 0 : i32
    %c0_i32_0 = arith.constant 0 : i32
    %c0_i32_1 = arith.constant 0 : i32
    return %c0_i32, %c0_i32_0 : i32, i32
  }
  func.func @transform_12(%arg0: i32) -> (i32, i32) {
    %c0_i32 = arith.constant 0 : i32
    %c0_i32_0 = arith.constant 0 : i32
    %c0_i32_1 = arith.constant 0 : i32
    return %c0_i32, %c0_i32_0 : i32, i32
  }
  func.func @transform_13(%arg0: i32) -> (i32, i32) {
    %c0_i32 = arith.constant 0 : i32
    %c0_i32_0 = arith.constant 0 : i32
    %c0_i32_1 = arith.constant 0 : i32
    return %c0_i32, %c0_i32_0 : i32, i32
  }
  func.func @transform_14(%arg0: i32) -> (i32, i32) {
    %c0_i32 = arith.constant 0 : i32
    %c0_i32_0 = arith.constant 0 : i32
    %c0_i32_1 = arith.constant 0 : i32
    return %c0_i32, %c0_i32_0 : i32, i32
  }
  func.func @transform_15(%arg0: i32) -> (i32, i32) {
    %c0_i32 = arith.constant 0 : i32
    %c0_i32_0 = arith.constant 0 : i32
    %c0_i32_1 = arith.constant 0 : i32
    return %c0_i32, %c0_i32_0 : i32, i32
  }
  func.func @transform_16(%arg0: i32) -> (i32, i32) {
    %c0_i32 = arith.constant 0 : i32
    %c0_i32_0 = arith.constant 0 : i32
    %c0_i32_1 = arith.constant 0 : i32
    return %c0_i32, %c0_i32_0 : i32, i32
  }
  func.func @transform_17(%arg0: i32) -> (i32, i32) {
    %c0_i32 = arith.constant 0 : i32
    %c0_i32_0 = arith.constant 0 : i32
    %c0_i32_1 = arith.constant 0 : i32
    return %c0_i32, %c0_i32_0 : i32, i32
  }
  func.func @transform_18(%arg0: i32) -> (i32, i32) {
    %c0_i32 = arith.constant 0 : i32
    %c0_i32_0 = arith.constant 0 : i32
    %c0_i32_1 = arith.constant 0 : i32
    return %c0_i32, %c0_i32_0 : i32, i32
  }
  func.func @transform_19(%arg0: i32) -> (i32, i32) {
    %c0_i32 = arith.constant 0 : i32
    %c0_i32_0 = arith.constant 0 : i32
    return %arg0, %c0_i32 : i32, i32
  }
}

</mosaic_0001>

<llo_original>
// kernel: forward.1
$region0: #{forward.1}
  #allocation0 [shape = 'u32[]', space=smem, size = 0x4, offset = 0x4, fixed_abs, tag = 'smem constant byte address 0x4 - core index']
  #allocation1 [shape = 'u32[144,128]{1,0:T(1,128)}', space=vmem, size = 0x12000, scoped, tag = 'internal scratch']
  %s0 = inlined_call_operand.hbm [shape: f32[8,104], index: 0, kind: input, shape index: {}]
  %s1 = inlined_call_operand.hbm [shape: f32[6,8,32], index: 1, kind: input, shape index: {}]
  %s2 = inlined_call_operand.hbm [shape: f32[10,8,32], index: 2, kind: input, shape index: {}]
  %s3 = inlined_call_operand.hbm [shape: f32[8,32], index: 3, kind: input, shape index: {}]
  %s4 = inlined_call_operand.hbm [shape: f32[8,32], index: 4, kind: input, shape index: {}]
  %s5 = inlined_call_operand.hbm [shape: bf16[32,32], index: 5, kind: input, shape index: {}]
  %s6 = inlined_call_operand.hbm [shape: bf16[32,32], index: 6, kind: input, shape index: {}]
  %s7 = inlined_call_operand.hbm [shape: f32[1,32], index: 7, kind: input, shape index: {}]
  %s8 = inlined_call_operand.hbm [shape: f32[1,32], index: 8, kind: input, shape index: {}]
  %s9 = inlined_call_operand.hbm [shape: bf16[32,32], index: 9, kind: input, shape index: {}]
  %s10 = inlined_call_operand.hbm [shape: bf16[32,32], index: 10, kind: input, shape index: {}]
  %s11 = inlined_call_operand.hbm [shape: f32[1,32], index: 11, kind: input, shape index: {}]
  %s12 = inlined_call_operand.hbm [shape: f32[1,32], index: 12, kind: input, shape index: {}]
  %s13 = inlined_call_operand.hbm [shape: bf16[104,128], index: 13, kind: input, shape index: {}]
  %s14 = inlined_call_operand.hbm [shape: bf16[32,128], index: 14, kind: input, shape index: {}]
  %s15 = inlined_call_operand.hbm [shape: bf16[32,128], index: 15, kind: input, shape index: {}]
  %s16 = inlined_call_operand.hbm [shape: f32[1,128], index: 16, kind: input, shape index: {}]
  %s17 = inlined_call_operand.hbm [shape: bf16[32,20], index: 17, kind: input, shape index: {}]
  %s18 = inlined_call_operand.hbm [shape: f32[1,20], index: 18, kind: input, shape index: {}]
  %s19 = inlined_call_operand.hbm [shape: f32[8,384], index: 19, kind: output, shape index: {}]
  %s20 = sld [smem:[#allocation0]]
  $region162: #{forward.1} parent=0
    _
  %s22 = ssub.s32 1, %s20
  %s23 = scalar_select 0, %s22, %s20
  $region1: #{forward.1} parent=0
    #allocation2 [shape = 'u8[4096]{0}', space=vmem, size = 0x1000, scoped, tag = 'input window, operand 0, single buffered']
    #allocation3 [shape = 's32[1]{0}', space=sflag, size = 0x4, scoped, tag = 'scoped memory for forward.1']
    #allocation4 [shape = 's32[1]{0}', space=sflag, size = 0x4, scoped, tag = 'scoped memory for forward.1']
    #allocation5 [shape = 'u8[24576]{0}', space=vmem, size = 0x6000, scoped, tag = 'input window, operand 1, single buffered']
    #allocation6 [shape = 's32[1]{0}', space=sflag, size = 0x4, scoped, tag = 'scoped memory for forward.1']
    #allocation7 [shape = 'u8[40960]{0}', space=vmem, size = 0xa000, scoped, tag = 'input window, operand 2, single buffered']
    #allocation8 [shape = 'u8[4096]{0}', space=vmem, size = 0x1000, scoped, tag = 'input window, operand 3, single buffered']
    #allocation9 [shape = 's32[1]{0}', space=sflag, size = 0x4, scoped, tag = 'scoped memory for forward.1']
    #allocation10 [shape = 'u8[4096]{0}', space=vmem, size = 0x1000, scoped, tag = 'input window, operand 4, single buffered']
    #allocation11 [shape = 'u8[8192]{0}', space=vmem, size = 0x2000, scoped, tag = 'input window, operand 5, single buffered']
    #allocation12 [shape = 's32[1]{0}', space=sflag, size = 0x4, scoped, tag = 'scoped memory for forward.1']
    #allocation13 [shape = 'u8[8192]{0}', space=vmem, size = 0x2000, scoped, tag = 'input window, operand 6, single buffered']
    #allocation14 [shape = 'u8[512]{0}', space=vmem, size = 0x400, scoped, tag = 'input window, operand 7, single buffered']
    #allocation15 [shape = 's32[1]{0}', space=sflag, size = 0x4, scoped, tag = 'scoped memory for forward.1']
    #allocation16 [shape = 'u8[512]{0}', space=vmem, size = 0x400, scoped, tag = 'input window, operand 8, single buffered']
    #allocation17 [shape = 'u8[8192]{0}', space=vmem, size = 0x2000, scoped, tag = 'input window, operand 9, single buffered']
    #allocation18 [shape = 's32[1]{0}', space=sflag, size = 0x4, scoped, tag = 'scoped memory for forward.1']
    #allocation19 [shape = 'u8[8192]{0}', space=vmem, size = 0x2000, scoped, tag = 'input window, operand 10, single buffered']
    #allocation20 [shape = 'u8[512]{0}', space=vmem, size = 0x400, scoped, tag = 'input window, operand 11, single buffered']
    #allocation21 [shape = 's32[1]{0}', space=sflag, size = 0x4, scoped, tag = 'scoped memory for forward.1']
    #allocation22 [shape = 'u8[512]{0}', space=vmem, size = 0x400, scoped, tag = 'input window, operand 12, single buffered']
    #allocation23 [shape = 'u8[26624]{0}', space=vmem, size = 0x6800, scoped, tag = 'input window, operand 13, single buffered']
    #allocation24 [shape = 's32[1]{0}', space=sflag, size = 0x4, scoped, tag = 'scoped memory for forward.1']
    #allocation25 [shape = 'u8[8192]{0}', space=vmem, size = 0x2000, scoped, tag = 'input window, operand 14, single buffered']
    #allocation26 [shape = 'u8[8192]{0}', space=vmem, size = 0x2000, scoped, tag = 'input window, operand 15, single buffered']
    #allocation27 [shape = 's32[1]{0}', space=sflag, size = 0x4, scoped, tag = 'scoped memory for forward.1']
    #allocation28 [shape = 'u8[512]{0}', space=vmem, size = 0x400, scoped, tag = 'input window, operand 16, single buffered']
    #allocation29 [shape = 'u8[8192]{0}', space=vmem, size = 0x2000, scoped, tag = 'input window, operand 17, single buffered']
    #allocation30 [shape = 's32[1]{0}', space=sflag, size = 0x4, scoped, tag = 'scoped memory for forward.1']
    #allocation31 [shape = 'u8[512]{0}', space=vmem, size = 0x400, scoped, tag = 'input window, operand 18, single buffered']
    #allocation32 [shape = 'u8[12288]{0}', space=vmem, size = 0x3000, scoped, tag = 'output window, operand 0, single buffered']
    %24 = vsyncpa [#allocation3], 0
    %25 = vsyncpa [#allocation6], 0
    %26 = vsyncpa [#allocation9], 0
    %27 = vsyncpa [#allocation12], 0
    %28 = vsyncpa [#allocation15], 0
    %29 = vsyncpa [#allocation18], 0
    %30 = vsyncpa [#allocation21], 0
    %31 = vsyncpa [#allocation24], 0
    %32 = vsyncpa [#allocation27], 0
    %33 = vsyncpa [#allocation30], 0
    %34 = vsyncpa [#allocation4], 0
    // Predicated region
    $region2: #{forward.1} parent=1 // pred_check
      _
    $region3: #{forward.1} parent=1 // pred_check_branch
      %36 = sbr.rel (0) target = $region5
    $region4: #{forward.1} parent=1 // pred_region
      %s38 = ssub.s32 128, 128
      %39 = vsyncadd [#allocation3], %s38
      %s41 = sshll.u32 [#allocation2], 4
      %s42 = int_to_ptr.vmem [resolvable:$true] %s41
      %44 = dma.hbm_to_vmem [thread:$0]  %s0, 128, %s42, [#allocation3]
    $region5: #{forward.1} parent=1 // pred_fallthru
      _
    // Predicated region
    $region6: #{forward.1} parent=1 // pred_check
      _
    $region7: #{forward.1} parent=1 // pred_check_branch
      %46 = sbr.rel (0) target = $region9
    $region8: #{forward.1} parent=1 // pred_region
      %s48 = ssub.s32 768, 768
      %49 = vsyncadd [#allocation6], %s48
      %s50 = sshll.u32 [#allocation5], 4
      %s51 = int_to_ptr.vmem [resolvable:$true] %s50
      %56 = dma.hbm_to_vmem [thread:$0]  %s1, 768, %s51, [#allocation6], 128, 128, 8
    $region9: #{forward.1} parent=1 // pred_fallthru
      _
    // Predicated region
    $region10: #{forward.1} parent=1 // pred_check
      _
    $region11: #{forward.1} parent=1 // pred_check_branch
      %58 = sbr.rel (0) target = $region13
    $region12: #{forward.1} parent=1 // pred_region
      %s60 = ssub.s32 1280, 1280
      %61 = vsyncadd [#allocation6], %s60
      %s62 = sshll.u32 [#allocation7], 4
      %s63 = int_to_ptr.vmem [resolvable:$true] %s62
      %68 = dma.hbm_to_vmem [thread:$0]  %s2, 1280, %s63, [#allocation6], 128, 128, 8
    $region13: #{forward.1} parent=1 // pred_fallthru
      _
    // Predicated region
    $region14: #{forward.1} parent=1 // pred_check
      _
    $region15: #{forward.1} parent=1 // pred_check_branch
      %70 = sbr.rel (0) target = $region17
    $region16: #{forward.1} parent=1 // pred_region
      %s72 = ssub.s32 128, 128
      %73 = vsyncadd [#allocation9], %s72
      %s75 = sshll.u32 [#allocation8], 4
      %s76 = int_to_ptr.vmem [resolvable:$true] %s75
      %78 = dma.hbm_to_vmem [thread:$0]  %s3, 128, %s76, [#allocation9]
    $region17: #{forward.1} parent=1 // pred_fallthru
      _
    // Predicated region
    $region18: #{forward.1} parent=1 // pred_check
      _
    $region19: #{forward.1} parent=1 // pred_check_branch
      %80 = sbr.rel (0) target = $region21
    $region20: #{forward.1} parent=1 // pred_region
      %s82 = ssub.s32 128, 128
      %83 = vsyncadd [#allocation9], %s82
      %s85 = sshll.u32 [#allocation10], 4
      %s86 = int_to_ptr.vmem [resolvable:$true] %s85
      %88 = dma.hbm_to_vmem [thread:$0]  %s4, 128, %s86, [#allocation9]
    $region21: #{forward.1} parent=1 // pred_fallthru
      _
    // Predicated region
    $region22: #{forward.1} parent=1 // pred_check
      _
    $region23: #{forward.1} parent=1 // pred_check_branch
      %90 = sbr.rel (0) target = $region25
    $region24: #{forward.1} parent=1 // pred_region
      %s92 = ssub.s32 256, 256
      %93 = vsyncadd [#allocation12], %s92
      %s94 = sshll.u32 [#allocation11], 4
      %s95 = int_to_ptr.vmem [resolvable:$true] %s94
      %100 = dma.hbm_to_vmem [thread:$0]  %s5, 256, %s95, [#allocation12], 64, 64, 4
    $region25: #{forward.1} parent=1 // pred_fallthru
      _
    // Predicated region
    $region26: #{forward.1} parent=1 // pred_check
      _
    $region27: #{forward.1} parent=1 // pred_check_branch
      %102 = sbr.rel (0) target = $region29
    $region28: #{forward.1} parent=1 // pred_region
      %s104 = ssub.s32 256, 256
      %105 = vsyncadd [#allocation12], %s104
      %s106 = sshll.u32 [#allocation13], 4
      %s107 = int_to_ptr.vmem [resolvable:$true] %s106
      %112 = dma.hbm_to_vmem [thread:$0]  %s6, 256, %s107, [#allocation12], 64, 64, 4
    $region29: #{forward.1} parent=1 // pred_fallthru
      _
    // Predicated region
    $region30: #{forward.1} parent=1 // pred_check
      _
    $region31: #{forward.1} parent=1 // pred_check_branch
      %114 = sbr.rel (0) target = $region33
    $region32: #{forward.1} parent=1 // pred_region
      %s116 = ssub.s32 16, 16
      %117 = vsyncadd [#allocation15], %s116
      %s119 = sshll.u32 [#allocation14], 4
      %s120 = int_to_ptr.vmem [resolvable:$true] %s119
      %122 = dma.hbm_to_vmem [thread:$0]  %s7, 16, %s120, [#allocation15]
    $region33: #{forward.1} parent=1 // pred_fallthru
      _
    // Predicated region
    $region34: #{forward.1} parent=1 // pred_check
      _
    $region35: #{forward.1} parent=1 // pred_check_branch
      %124 = sbr.rel (0) target = $region37
    $region36: #{forward.1} parent=1 // pred_region
      %s126 = ssub.s32 16, 16
      %127 = vsyncadd [#allocation15], %s126
      %s129 = sshll.u32 [#allocation16], 4
      %s130 = int_to_ptr.vmem [resolvable:$true] %s129
      %132 = dma.hbm_to_vmem [thread:$0]  %s8, 16, %s130, [#allocation15]
    $region37: #{forward.1} parent=1 // pred_fallthru
      _
    // Predicated region
    $region38: #{forward.1} parent=1 // pred_check
      _
    $region39: #{forward.1} parent=1 // pred_check_branch
      %134 = sbr.rel (0) target = $region41
    $region40: #{forward.1} parent=1 // pred_region
      %s136 = ssub.s32 256, 256
      %137 = vsyncadd [#allocation18], %s136
      %s138 = sshll.u32 [#allocation17], 4
      %s139 = int_to_ptr.vmem [resolvable:$true] %s138
      %144 = dma.hbm_to_vmem [thread:$0]  %s9, 256, %s139, [#allocation18], 64, 64, 4
    $region41: #{forward.1} parent=1 // pred_fallthru
      _
    // Predicated region
    $region42: #{forward.1} parent=1 // pred_check
      _
    $region43: #{forward.1} parent=1 // pred_check_branch
      %146 = sbr.rel (0) target = $region45
    $region44: #{forward.1} parent=1 // pred_region
      %s148 = ssub.s32 256, 256
      %149 = vsyncadd [#allocation18], %s148
      %s150 = sshll.u32 [#allocation19], 4
      %s151 = int_to_ptr.vmem [resolvable:$true] %s150
      %156 = dma.hbm_to_vmem [thread:$0]  %s10, 256, %s151, [#allocation18], 64, 64, 4
    $region45: #{forward.1} parent=1 // pred_fallthru
      _
    // Predicated region
    $region46: #{forward.1} parent=1 // pred_check
      _
    $region47: #{forward.1} parent=1 // pred_check_branch
      %158 = sbr.rel (0) target = $region49
    $region48: #{forward.1} parent=1 // pred_region
      %s160 = ssub.s32 16, 16
      %161 = vsyncadd [#allocation21], %s160
      %s163 = sshll.u32 [#allocation20], 4
      %s164 = int_to_ptr.vmem [resolvable:$true] %s163
      %166 = dma.hbm_to_vmem [thread:$0]  %s11, 16, %s164, [#allocation21]
    $region49: #{forward.1} parent=1 // pred_fallthru
      _
    // Predicated region
    $region50: #{forward.1} parent=1 // pred_check
      _
    $region51: #{forward.1} parent=1 // pred_check_branch
      %168 = sbr.rel (0) target = $region53
    $region52: #{forward.1} parent=1 // pred_region
      %s170 = ssub.s32 16, 16
      %171 = vsyncadd [#allocation21], %s170
      %s173 = sshll.u32 [#allocation22], 4
      %s174 = int_to_ptr.vmem [resolvable:$true] %s173
      %176 = dma.hbm_to_vmem [thread:$0]  %s12, 16, %s174, [#allocation21]
    $region53: #{forward.1} parent=1 // pred_fallthru
      _
    // Predicated region
    $region54: #{forward.1} parent=1 // pred_check
      _
    $region55: #{forward.1} parent=1 // pred_check_branch
      %178 = sbr.rel (0) target = $region57
    $region56: #{forward.1} parent=1 // pred_region
      %s180 = ssub.s32 832, 832
      %181 = vsyncadd [#allocation24], %s180
      %s182 = sshll.u32 [#allocation23], 4
      %s183 = int_to_ptr.vmem [resolvable:$true] %s182
      %188 = dma.hbm_to_vmem [thread:$0]  %s13, 832, %s183, [#allocation24], 64, 64, 4
    $region57: #{forward.1} parent=1 // pred_fallthru
      _
    // Predicated region
    $region58: #{forward.1} parent=1 // pred_check
      _
    $region59: #{forward.1} parent=1 // pred_check_branch
      %190 = sbr.rel (0) target = $region61
    $region60: #{forward.1} parent=1 // pred_region
      %s192 = ssub.s32 256, 256
      %193 = vsyncadd [#allocation24], %s192
      %s194 = sshll.u32 [#allocation25], 4
      %s195 = int_to_ptr.vmem [resolvable:$true] %s194
      %200 = dma.hbm_to_vmem [thread:$0]  %s14, 256, %s195, [#allocation24], 64, 64, 4
    $region61: #{forward.1} parent=1 // pred_fallthru
      _
    // Predicated region
    $region62: #{forward.1} parent=1 // pred_check
      _
    $region63: #{forward.1} parent=1 // pred_check_branch
      %202 = sbr.rel (0) target = $region65
    $region64: #{forward.1} parent=1 // pred_region
      %s204 = ssub.s32 256, 256
      %205 = vsyncadd [#allocation27], %s204
      %s206 = sshll.u32 [#allocation26], 4
      %s207 = int_to_ptr.vmem [resolvable:$true] %s206
      %212 = dma.hbm_to_vmem [thread:$0]  %s15, 256, %s207, [#allocation27], 64, 64, 4
    $region65: #{forward.1} parent=1 // pred_fallthru
      _
    // Predicated region
    $region66: #{forward.1} parent=1 // pred_check
      _
    $region67: #{forward.1} parent=1 // pred_check_branch
      %214 = sbr.rel (0) target = $region69
    $region68: #{forward.1} parent=1 // pred_region
      %s216 = ssub.s32 16, 16
      %217 = vsyncadd [#allocation27], %s216
      %s219 = sshll.u32 [#allocation28], 4
      %s220 = int_to_ptr.vmem [resolvable:$true] %s219
      %222 = dma.hbm_to_vmem [thread:$0]  %s16, 16, %s220, [#allocation27]
    $region69: #{forward.1} parent=1 // pred_fallthru
      _
    // Predicated region
    $region70: #{forward.1} parent=1 // pred_check
      _
    $region71: #{forward.1} parent=1 // pred_check_branch
      %224 = sbr.rel (0) target = $region73
    $region72: #{forward.1} parent=1 // pred_region
      %s226 = ssub.s32 256, 256
      %227 = vsyncadd [#allocation30], %s226
      %s228 = sshll.u32 [#allocation29], 4
      %s229 = int_to_ptr.vmem [resolvable:$true] %s228
      %234 = dma.hbm_to_vmem [thread:$0]  %s17, 256, %s229, [#allocation30], 64, 64, 4
    $region73: #{forward.1} parent=1 // pred_fallthru
      _
    // Predicated region
    $region74: #{forward.1} parent=1 // pred_check
      _
    $region75: #{forward.1} parent=1 // pred_check_branch
      %236 = sbr.rel (0) target = $region77
    $region76: #{forward.1} parent=1 // pred_region
      %s238 = ssub.s32 16, 16
      %239 = vsyncadd [#allocation30], %s238
      %s241 = sshll.u32 [#allocation31], 4
      %s242 = int_to_ptr.vmem [resolvable:$true] %s241
      %244 = dma.hbm_to_vmem [thread:$0]  %s18, 16, %s242, [#allocation30]
    $region77: #{forward.1} parent=1 // pred_fallthru
      _
    // Predicated region
    $region78: #{forward.1} parent=1 // pred_check
      _
    $region79: #{forward.1} parent=1 // pred_check_branch
      %246 = sbr.rel (0) target = $region81
    $region80: #{forward.1} parent=1 // pred_region
      %247 = dma.done [#allocation3], 128
    $region81: #{forward.1} parent=1 // pred_fallthru
      _
    // Predicated region
    $region82: #{forward.1} parent=1 // pred_check
      _
    $region83: #{forward.1} parent=1 // pred_check_branch
      %249 = sbr.rel (0) target = $region85
    $region84: #{forward.1} parent=1 // pred_region
      %250 = dma.done [#allocation6], 768
    $region85: #{forward.1} parent=1 // pred_fallthru
      _
    // Predicated region
    $region86: #{forward.1} parent=1 // pred_check
      _
    $region87: #{forward.1} parent=1 // pred_check_branch
      %252 = sbr.rel (0) target = $region89
    $region88: #{forward.1} parent=1 // pred_region
      %253 = dma.done [#allocation6], 1280
    $region89: #{forward.1} parent=1 // pred_fallthru
      _
    // Predicated region
    $region90: #{forward.1} parent=1 // pred_check
      _
    $region91: #{forward.1} parent=1 // pred_check_branch
      %255 = sbr.rel (0) target = $region93
    $region92: #{forward.1} parent=1 // pred_region
      %256 = dma.done [#allocation9], 128
    $region93: #{forward.1} parent=1 // pred_fallthru
      _
    // Predicated region
    $region94: #{forward.1} parent=1 // pred_check
      _
    $region95: #{forward.1} parent=1 // pred_check_branch
      %258 = sbr.rel (0) target = $region97
    $region96: #{forward.1} parent=1 // pred_region
      %259 = dma.done [#allocation9], 128
    $region97: #{forward.1} parent=1 // pred_fallthru
      _
    // Predicated region
    $region98: #{forward.1} parent=1 // pred_check
      _
    $region99: #{forward.1} parent=1 // pred_check_branch
      %261 = sbr.rel (0) target = $region101
    $region100: #{forward.1} parent=1 // pred_region
      %262 = dma.done [#allocation12], 256
    $region101: #{forward.1} parent=1 // pred_fallthru
      _
    // Predicated region
    $region102: #{forward.1} parent=1 // pred_check
      _
    $region103: #{forward.1} parent=1 // pred_check_branch
      %264 = sbr.rel (0) target = $region105
    $region104: #{forward.1} parent=1 // pred_region
      %265 = dma.done [#allocation12], 256
    $region105: #{forward.1} parent=1 // pred_fallthru
      _
    // Predicated region
    $region106: #{forward.1} parent=1 // pred_check
      _
    $region107: #{forward.1} parent=1 // pred_check_branch
      %267 = sbr.rel (0) target = $region109
    $region108: #{forward.1} parent=1 // pred_region
      %268 = dma.done [#allocation15], 16
    $region109: #{forward.1} parent=1 // pred_fallthru
      _
    // Predicated region
    $region110: #{forward.1} parent=1 // pred_check
      _
    $region111: #{forward.1} parent=1 // pred_check_branch
      %270 = sbr.rel (0) target = $region113
    $region112: #{forward.1} parent=1 // pred_region
      %271 = dma.done [#allocation15], 16
    $region113: #{forward.1} parent=1 // pred_fallthru
      _
    // Predicated region
    $region114: #{forward.1} parent=1 // pred_check
      _
    $region115: #{forward.1} parent=1 // pred_check_branch
      %273 = sbr.rel (0) target = $region117
    $region116: #{forward.1} parent=1 // pred_region
      %274 = dma.done [#allocation18], 256
    $region117: #{forward.1} parent=1 // pred_fallthru
      _
    // Predicated region
    $region118: #{forward.1} parent=1 // pred_check
      _
    $region119: #{forward.1} parent=1 // pred_check_branch
      %276 = sbr.rel (0) target = $region121
    $region120: #{forward.1} parent=1 // pred_region
      %277 = dma.done [#allocation18], 256
    $region121: #{forward.1} parent=1 // pred_fallthru
      _
    // Predicated region
    $region122: #{forward.1} parent=1 // pred_check
      _
    $region123: #{forward.1} parent=1 // pred_check_branch
      %279 = sbr.rel (0) target = $region125
    $region124: #{forward.1} parent=1 // pred_region
      %280 = dma.done [#allocation21], 16
    $region125: #{forward.1} parent=1 // pred_fallthru
      _
    // Predicated region
    $region126: #{forward.1} parent=1 // pred_check
      _
    $region127: #{forward.1} parent=1 // pred_check_branch
      %282 = sbr.rel (0) target = $region129
    $region128: #{forward.1} parent=1 // pred_region
      %283 = dma.done [#allocation21], 16
    $region129: #{forward.1} parent=1 // pred_fallthru
      _
    // Predicated region
    $region130: #{forward.1} parent=1 // pred_check
      _
    $region131: #{forward.1} parent=1 // pred_check_branch
      %285 = sbr.rel (0) target = $region133
    $region132: #{forward.1} parent=1 // pred_region
      %286 = dma.done [#allocation24], 832
    $region133: #{forward.1} parent=1 // pred_fallthru
      _
    // Predicated region
    $region134: #{forward.1} parent=1 // pred_check
      _
    $region135: #{forward.1} parent=1 // pred_check_branch
      %288 = sbr.rel (0) target = $region137
    $region136: #{forward.1} parent=1 // pred_region
      %289 = dma.done [#allocation24], 256
    $region137: #{forward.1} parent=1 // pred_fallthru
      _
    // Predicated region
    $region138: #{forward.1} parent=1 // pred_check
      _
    $region139: #{forward.1} parent=1 // pred_check_branch
      %291 = sbr.rel (0) target = $region141
    $region140: #{forward.1} parent=1 // pred_region
      %292 = dma.done [#allocation27], 256
    $region141: #{forward.1} parent=1 // pred_fallthru
      _
    // Predicated region
    $region142: #{forward.1} parent=1 // pred_check
      _
    $region143: #{forward.1} parent=1 // pred_check_branch
      %294 = sbr.rel (0) target = $region145
    $region144: #{forward.1} parent=1 // pred_region
      %295 = dma.done [#allocation27], 16
    $region145: #{forward.1} parent=1 // pred_fallthru
      _
    // Predicated region
    $region146: #{forward.1} parent=1 // pred_check
      _
    $region147: #{forward.1} parent=1 // pred_check_branch
      %297 = sbr.rel (0) target = $region149
    $region148: #{forward.1} parent=1 // pred_region
      %298 = dma.done [#allocation30], 256
    $region149: #{forward.1} parent=1 // pred_fallthru
      _
    // Predicated region
    $region150: #{forward.1} parent=1 // pred_check
      _
    $region151: #{forward.1} parent=1 // pred_check_branch
      %300 = sbr.rel (0) target = $region153
    $region152: #{forward.1} parent=1 // pred_region
      %301 = dma.done [#allocation30], 16
    $region153: #{forward.1} parent=1 // pred_fallthru
      _
    %v303 = vld [vmem:[#allocation8] sm:$0xff]
    %v304 = vpack.c.bf16 %v303, %v303
    %v305 = vld [vmem:[#allocation5] sm:$0xff]
    %v306 = vld [vmem:[#allocation5 + $0x8] sm:$0xff]
    %v307 = vld [vmem:[#allocation5 + $0x10] sm:$0xff]
    %v308 = vld [vmem:[#allocation5 + $0x18] sm:$0xff]
    %v309 = vld [vmem:[#allocation5 + $0x20] sm:$0xff]
    %v310 = vld [vmem:[#allocation5 + $0x28] sm:$0xff]
    %v311 = vld [vmem:[#allocation11] sm:$0xf]
    %v312 = vld [vmem:[#allocation11 + $0x4] sm:$0xf]
    %v313 = vld [vmem:[#allocation11 + $0x8] sm:$0xf]
    %v314 = vld [vmem:[#allocation11 + $0xc] sm:$0xf]
    %v319 = vunpack.c.l.b16 %v311
    %v320 = vunpack.c.l.b16 %v312
    %v321 = vunpack.c.l.b16 %v313
    %v322 = vunpack.c.l.b16 %v314
    %v323 = vpack.c.b16 %v320, %v319
    %v324 = vpack.c.b16 %v322, %v321
    %vm327 = vcmask 261120
    %v329 = vsel %vm327, %v304, 0
    %331 = vmatprep.subr.bf16.mxu0 0
    %332 = vmatpush1.bf16.msra.mxu0 %v323
    %333 = vmatprep.subr.bf16.mxu0 0
    %334 = vmatpush1.bf16.msra.mxu0 %v324
    %335 = vmatprep.subr.bf16.mxu0 0
    %336 = vmatpush1.bf16.msra.mxu0 0
    %337 = vmatprep.subr.bf16.mxu0 0
    %338 = vmatpush1.bf16.msra.mxu0 0
    %339 = vmatprep.subr.bf16.mxu0 0
    %340 = vmatpush1.bf16.msra.mxu0 0
    %341 = vmatprep.subr.bf16.mxu0 0
    %342 = vmatpush1.bf16.msra.mxu0 0
    %343 = vmatprep.subr.bf16.mxu0 0
    %344 = vmatpush1.bf16.msra.mxu0 0
    %345 = vmatprep.subr.bf16.mxu0 0
    %346 = vmatpush1.bf16.msra.mxu0 0
    %347 = vmatprep.subr.bf16.mxu0 0
    %348 = vmatpush1.bf16.msra.mxu0 0
    %349 = vmatprep.subr.bf16.mxu0 0
    %350 = vmatpush1.bf16.msra.mxu0 0
    %351 = vmatprep.subr.bf16.mxu0 0
    %352 = vmatpush1.bf16.msra.mxu0 0
    %353 = vmatprep.subr.bf16.mxu0 0
    %354 = vmatpush1.bf16.msra.mxu0 0
    %355 = vmatprep.subr.bf16.mxu0 0
    %356 = vmatpush1.bf16.msra.mxu0 0
    %357 = vmatprep.subr.bf16.mxu0 0
    %358 = vmatpush1.bf16.msra.mxu0 0
    %359 = vmatprep.subr.bf16.mxu0 0
    %360 = vmatpush1.bf16.msra.mxu0 0
    %361 = vmatprep.subr.bf16.mxu0 0
    %362 = vmatpush1.bf16.msra.mxu0 0
    %363 = vmatprep.mubr.bf16.mxu0 0
    %364 = vmatmul.mubr.bf16.gmra.mrb[0].mxu0 %v329
    %v365 = vpop.f32.mrb[0].mxu0
    %v366 = vadd.f32 0.0, %v365
    %v367 = vpop.f32.mrb[0].mxu0
    %v368 = vpop.f32.mrb[0].mxu0
    %v369 = vpop.f32.mrb[0].mxu0
    %370 = vdwg.mxu0
    %v371 = vpack.c.bf16 %v306, %v305
    %v372 = vpack.c.bf16 %v308, %v307
    %v373 = vpack.c.bf16 %v310, %v309
    %v374 = vld [vmem:[#allocation13] sm:$0xf]
    %v375 = vld [vmem:[#allocation13 + $0x4] sm:$0xf]
    %v376 = vld [vmem:[#allocation13 + $0x8] sm:$0xf]
    %v377 = vld [vmem:[#allocation13 + $0xc] sm:$0xf]
    %v382 = vunpack.c.l.b16 %v374
    %v383 = vunpack.c.l.b16 %v375
    %v384 = vunpack.c.l.b16 %v376
    %v385 = vunpack.c.l.b16 %v377
    %v386 = vpack.c.b16 %v383, %v382
    %v387 = vpack.c.b16 %v385, %v384
    %v391 = vsel %vm327, %v371, 0
    %v394 = vsel %vm327, %v372, 0
    %v397 = vsel %vm327, %v373, 0
    %399 = vmatprep.subr.bf16.mxu0 0
    %400 = vmatpush1.bf16.msra.mxu0 %v386
    %401 = vmatprep.subr.bf16.mxu0 0
    %402 = vmatpush1.bf16.msra.mxu0 %v387
    %403 = vmatprep.subr.bf16.mxu0 0
    %404 = vmatpush1.bf16.msra.mxu0 0
    %405 = vmatprep.subr.bf16.mxu0 0
    %406 = vmatpush1.bf16.msra.mxu0 0
    %407 = vmatprep.subr.bf16.mxu0 0
    %408 = vmatpush1.bf16.msra.mxu0 0
    %409 = vmatprep.subr.bf16.mxu0 0
    %410 = vmatpush1.bf16.msra.mxu0 0
    %411 = vmatprep.subr.bf16.mxu0 0
    %412 = vmatpush1.bf16.msra.mxu0 0
    %413 = vmatprep.subr.bf16.mxu0 0
    %414 = vmatpush1.bf16.msra.mxu0 0
    %415 = vmatprep.subr.bf16.mxu0 0
    %416 = vmatpush1.bf16.msra.mxu0 0
    %417 = vmatprep.subr.bf16.mxu0 0
    %418 = vmatpush1.bf16.msra.mxu0 0
    %419 = vmatprep.subr.bf16.mxu0 0
    %420 = vmatpush1.bf16.msra.mxu0 0
    %421 = vmatprep.subr.bf16.mxu0 0
    %422 = vmatpush1.bf16.msra.mxu0 0
    %423 = vmatprep.subr.bf16.mxu0 0
    %424 = vmatpush1.bf16.msra.mxu0 0
    %425 = vmatprep.subr.bf16.mxu0 0
    %426 = vmatpush1.bf16.msra.mxu0 0
    %427 = vmatprep.subr.bf16.mxu0 0
    %428 = vmatpush1.bf16.msra.mxu0 0
    %429 = vmatprep.subr.bf16.mxu0 0
    %430 = vmatpush1.bf16.msra.mxu0 0
    %431 = vmatprep.mubr.bf16.mxu0 0
    %432 = vmatmul.mubr.bf16.gmra.mrb[0].mxu0 %v391
    %v433 = vpop.f32.mrb[0].mxu0
    %v434 = vadd.f32 0.0, %v433
    %v435 = vpop.f32.mrb[0].mxu0
    %v436 = vpop.f32.mrb[0].mxu0
    %v437 = vadd.f32 0.0, %v436
    %v438 = vpop.f32.mrb[0].mxu0
    %439 = vmatprep.mubr.bf16.mxu0 0
    %440 = vmatmul.mubr.bf16.gmra.mrb[0].mxu0 %v394
    %v441 = vpop.f32.mrb[0].mxu0
    %v442 = vadd.f32 0.0, %v441
    %v443 = vpop.f32.mrb[0].mxu0
    %v444 = vpop.f32.mrb[0].mxu0
    %v445 = vadd.f32 0.0, %v444
    %v446 = vpop.f32.mrb[0].mxu0
    %447 = vmatprep.mubr.bf16.mxu0 0
    %448 = vmatmul.mubr.bf16.gmra.mrb[0].mxu0 %v397
    %v449 = vpop.f32.mrb[0].mxu0
    %v450 = vadd.f32 0.0, %v449
    %v451 = vpop.f32.mrb[0].mxu0
    %v452 = vpop.f32.mrb[0].mxu0
    %v453 = vadd.f32 0.0, %v452
    %v454 = vpop.f32.mrb[0].mxu0
    %455 = vdwg.mxu0
    %v456 = vadd.f32 %v434, %v366
    %v457 = vadd.f32 %v437, %v366
    %v458 = vadd.f32 %v442, %v366
    %v459 = vadd.f32 %v445, %v366
    %v460 = vadd.f32 %v450, %v366
    %v461 = vadd.f32 %v453, %v366
    %v462 = vld [vmem:[#allocation14] sm:$0x1]
    %v464 = vlaneseq
    %v465 = vshrl.u32 %v464, 7
    %v466 = vsub.s32 0, %v465
    %v467 = vrot.slane %v462, %v466
    %v469 = vadd.f32 %v456, %v467
    %v470 = vadd.f32 %v457, %v467
    %v471 = vadd.f32 %v458, %v467
    %v472 = vadd.f32 %v459, %v467
    %v473 = vadd.f32 %v460, %v467
    %v474 = vadd.f32 %v461, %v467
    %v475 = vtanh.pop %v469
    %v476 = vtanh.pop %v470
    %v477 = vtanh.pop %v471
    %v478 = vtanh.pop %v472
    %v479 = vtanh.pop %v473
    %v480 = vtanh.pop %v474
    %v481 = vld [vmem:[#allocation16] sm:$0x1]
    %v483 = vlaneseq
    %v484 = vshrl.u32 %v483, 7
    %v485 = vsub.s32 0, %v484
    %v486 = vrot.slane %v481, %v485
    %v488 = vmul.f32 %v475, %v486
    %v489 = vmul.f32 %v476, %v486
    %v490 = vmul.f32 %v477, %v486
    %v491 = vmul.f32 %v478, %v486
    %v492 = vmul.f32 %v479, %v486
    %v493 = vmul.f32 %v480, %v486
    %v494 = vsel %vm327, %v488, 0.0
    %495 = vadd.xlane.f32.xlu0 %v494
    %v496 = vpop.xlane.xlu0 %495
    %v497 = vsel %vm327, %v489, 0.0
    %498 = vadd.xlane.f32.xlu0 %v497
    %v499 = vpop.xlane.xlu0 %498
    %v500 = vsel %vm327, %v490, 0.0
    %501 = vadd.xlane.f32.xlu0 %v500
    %v502 = vpop.xlane.xlu0 %501
    %v503 = vsel %vm327, %v491, 0.0
    %504 = vadd.xlane.f32.xlu0 %v503
    %v505 = vpop.xlane.xlu0 %504
    %v506 = vsel %vm327, %v492, 0.0
    %507 = vadd.xlane.f32.xlu0 %v506
    %v508 = vpop.xlane.xlu0 %507
    %v509 = vsel %vm327, %v493, 0.0
    %510 = vadd.xlane.f32.xlu0 %v509
    %v511 = vpop.xlane.xlu0 %510
    %v512 = vmax.f32 %v496, %v508
    %v513 = vmax.f32 %v499, %v511
    %v514 = vmax.f32 %v512, %v513
    %v515 = vmax.f32 %v502, %v505
    %v516 = vmax.f32 %v514, %v515
    %v517 = vsub.f32 %v496, %v516
    %v518 = vsub.f32 %v499, %v516
    %v519 = vsub.f32 %v502, %v516
    %v520 = vsub.f32 %v505, %v516
    %v521 = vsub.f32 %v508, %v516
    %v522 = vsub.f32 %v511, %v516
    %v523 = vmul.f32 %v517, 1.442695
    %v524 = vpow.pop %v523
    %v525 = vmul.f32 %v518, 1.442695
    %v526 = vpow.pop %v525
    %v527 = vmul.f32 %v519, 1.442695
    %v528 = vpow.pop %v527
    %v529 = vmul.f32 %v520, 1.442695
    %v530 = vpow.pop %v529
    %v531 = vmul.f32 %v521, 1.442695
    %v532 = vpow.pop %v531
    %v533 = vmul.f32 %v522, 1.442695
    %v534 = vpow.pop %v533
    %v535 = vadd.f32 %v524, %v526
    %v536 = vadd.f32 %v535, %v528
    %v537 = vadd.f32 %v536, %v530
    %v538 = vadd.f32 %v537, %v532
    %v539 = vadd.f32 %v538, %v534
    %v540 = vrcp.pop %v539
    %v541 = vmul.f32 %v524, %v540
    %v542 = vmul.f32 %v526, %v540
    %v543 = vmul.f32 %v528, %v540
    %v544 = vmul.f32 %v530, %v540
    %v545 = vmul.f32 %v532, %v540
    %v546 = vmul.f32 %v534, %v540
    %v547 = vmul.f32 %v541, %v305
    %v548 = vmul.f32 %v542, %v306
    %v549 = vmul.f32 %v543, %v307
    %v550 = vmul.f32 %v544, %v308
    %v551 = vmul.f32 %v545, %v309
    %v552 = vmul.f32 %v546, %v310
    %v553 = vsel %vm327, %v547, 0.0
    %v554 = vsel %vm327, %v548, 0.0
    %v555 = vadd.f32 %v553, %v554
    %v556 = vsel %vm327, %v549, 0.0
    %v557 = vadd.f32 %v555, %v556
    %v558 = vsel %vm327, %v550, 0.0
    %v559 = vadd.f32 %v557, %v558
    %v560 = vsel %vm327, %v551, 0.0
    %v561 = vadd.f32 %v559, %v560
    %v562 = vsel %vm327, %v552, 0.0
    %v563 = vadd.f32 %v561, %v562
    %v564 = vld [vmem:[#allocation7] sm:$0xff]
    %v565 = vld [vmem:[#allocation7 + $0x8] sm:$0xff]
    %v566 = vld [vmem:[#allocation7 + $0x10] sm:$0xff]
    %v567 = vld [vmem:[#allocation7 + $0x18] sm:$0xff]
    %v568 = vld [vmem:[#allocation7 + $0x20] sm:$0xff]
    %v569 = vld [vmem:[#allocation7 + $0x28] sm:$0xff]
    %v570 = vld [vmem:[#allocation7 + $0x30] sm:$0xff]
    %v571 = vld [vmem:[#allocation7 + $0x38] sm:$0xff]
    %v572 = vld [vmem:[#allocation7 + $0x40] sm:$0xff]
    %v573 = vld [vmem:[#allocation7 + $0x48] sm:$0xff]
    %v574 = vld [vmem:[#allocation17] sm:$0xf]
    %v575 = vld [vmem:[#allocation17 + $0x4] sm:$0xf]
    %v576 = vld [vmem:[#allocation17 + $0x8] sm:$0xf]
    %v577 = vld [vmem:[#allocation17 + $0xc] sm:$0xf]
    %v582 = vunpack.c.l.b16 %v574
    %v583 = vunpack.c.l.b16 %v575
    %v584 = vunpack.c.l.b16 %v576
    %v585 = vunpack.c.l.b16 %v577
    %v586 = vpack.c.b16 %v583, %v582
    %v587 = vpack.c.b16 %v585, %v584
    %590 = vmatprep.subr.bf16.mxu0 0
    %591 = vmatpush1.bf16.msra.mxu0 %v586
    %592 = vmatprep.subr.bf16.mxu0 0
    %593 = vmatpush1.bf16.msra.mxu0 %v587
    %594 = vmatprep.subr.bf16.mxu0 0
    %595 = vmatpush1.bf16.msra.mxu0 0
    %596 = vmatprep.subr.bf16.mxu0 0
    %597 = vmatpush1.bf16.msra.mxu0 0
    %598 = vmatprep.subr.bf16.mxu0 0
    %599 = vmatpush1.bf16.msra.mxu0 0
    %600 = vmatprep.subr.bf16.mxu0 0
    %601 = vmatpush1.bf16.msra.mxu0 0
    %602 = vmatprep.subr.bf16.mxu0 0
    %603 = vmatpush1.bf16.msra.mxu0 0
    %604 = vmatprep.subr.bf16.mxu0 0
    %605 = vmatpush1.bf16.msra.mxu0 0
    %606 = vmatprep.subr.bf16.mxu0 0
    %607 = vmatpush1.bf16.msra.mxu0 0
    %608 = vmatprep.subr.bf16.mxu0 0
    %609 = vmatpush1.bf16.msra.mxu0 0
    %610 = vmatprep.subr.bf16.mxu0 0
    %611 = vmatpush1.bf16.msra.mxu0 0
    %612 = vmatprep.subr.bf16.mxu0 0
    %613 = vmatpush1.bf16.msra.mxu0 0
    %614 = vmatprep.subr.bf16.mxu0 0
    %615 = vmatpush1.bf16.msra.mxu0 0
    %616 = vmatprep.subr.bf16.mxu0 0
    %617 = vmatpush1.bf16.msra.mxu0 0
    %618 = vmatprep.subr.bf16.mxu0 0
    %619 = vmatpush1.bf16.msra.mxu0 0
    %620 = vmatprep.subr.bf16.mxu0 0
    %621 = vmatpush1.bf16.msra.mxu0 0
    %622 = vmatprep.mubr.bf16.mxu0 0
    %623 = vmatmul.mubr.bf16.gmra.mrb[0].mxu0 %v329
    %v624 = vpop.f32.mrb[0].mxu0
    %v625 = vadd.f32 0.0, %v624
    %v626 = vpop.f32.mrb[0].mxu0
    %v627 = vpop.f32.mrb[0].mxu0
    %v628 = vpop.f32.mrb[0].mxu0
    %629 = vdwg.mxu0
    %v630 = vpack.c.bf16 %v565, %v564
    %v631 = vpack.c.bf16 %v567, %v566
    %v632 = vpack.c.bf16 %v569, %v568
    %v633 = vpack.c.bf16 %v571, %v570
    %v634 = vpack.c.bf16 %v573, %v572
    %v635 = vld [vmem:[#allocation19] sm:$0xf]
    %v636 = vld [vmem:[#allocation19 + $0x4] sm:$0xf]
    %v637 = vld [vmem:[#allocation19 + $0x8] sm:$0xf]
    %v638 = vld [vmem:[#allocation19 + $0xc] sm:$0xf]
    %v643 = vunpack.c.l.b16 %v635
    %v644 = vunpack.c.l.b16 %v636
    %v645 = vunpack.c.l.b16 %v637
    %v646 = vunpack.c.l.b16 %v638
    %v647 = vpack.c.b16 %v644, %v643
    %v648 = vpack.c.b16 %v646, %v645
    %v652 = vsel %vm327, %v630, 0
    %v655 = vsel %vm327, %v631, 0
    %v658 = vsel %vm327, %v632, 0
    %v661 = vsel %vm327, %v633, 0
    %v664 = vsel %vm327, %v634, 0
    %666 = vmatprep.subr.bf16.mxu0 0
    %667 = vmatpush1.bf16.msra.mxu0 %v647
    %668 = vmatprep.subr.bf16.mxu0 0
    %669 = vmatpush1.bf16.msra.mxu0 %v648
    %670 = vmatprep.subr.bf16.mxu0 0
    %671 = vmatpush1.bf16.msra.mxu0 0
    %672 = vmatprep.subr.bf16.mxu0 0
    %673 = vmatpush1.bf16.msra.mxu0 0
    %674 = vmatprep.subr.bf16.mxu0 0
    %675 = vmatpush1.bf16.msra.mxu0 0
    %676 = vmatprep.subr.bf16.mxu0 0
    %677 = vmatpush1.bf16.msra.mxu0 0
    %678 = vmatprep.subr.bf16.mxu0 0
    %679 = vmatpush1.bf16.msra.mxu0 0
    %680 = vmatprep.subr.bf16.mxu0 0
    %681 = vmatpush1.bf16.msra.mxu0 0
    %682 = vmatprep.subr.bf16.mxu0 0
    %683 = vmatpush1.bf16.msra.mxu0 0
    %684 = vmatprep.subr.bf16.mxu0 0
    %685 = vmatpush1.bf16.msra.mxu0 0
    %686 = vmatprep.subr.bf16.mxu0 0
    %687 = vmatpush1.bf16.msra.mxu0 0
    %688 = vmatprep.subr.bf16.mxu0 0
    %689 = vmatpush1.bf16.msra.mxu0 0
    %690 = vmatprep.subr.bf16.mxu0 0
    %691 = vmatpush1.bf16.msra.mxu0 0
    %692 = vmatprep.subr.bf16.mxu0 0
    %693 = vmatpush1.bf16.msra.mxu0 0
    %694 = vmatprep.subr.bf16.mxu0 0
    %695 = vmatpush1.bf16.msra.mxu0 0
    %696 = vmatprep.subr.bf16.mxu0 0
    %697 = vmatpush1.bf16.msra.mxu0 0
    %698 = vmatprep.mubr.bf16.mxu0 0
    %699 = vmatmul.mubr.bf16.gmra.mrb[0].mxu0 %v652
    %v700 = vpop.f32.mrb[0].mxu0
    %v701 = vadd.f32 0.0, %v700
    %v702 = vpop.f32.mrb[0].mxu0
    %v703 = vpop.f32.mrb[0].mxu0
    %v704 = vadd.f32 0.0, %v703
    %v705 = vpop.f32.mrb[0].mxu0
    %706 = vmatprep.mubr.bf16.mxu0 0
    %707 = vmatmul.mubr.bf16.gmra.mrb[0].mxu0 %v655
    %v708 = vpop.f32.mrb[0].mxu0
    %v709 = vadd.f32 0.0, %v708
    %v710 = vpop.f32.mrb[0].mxu0
    %v711 = vpop.f32.mrb[0].mxu0
    %v712 = vadd.f32 0.0, %v711
    %v713 = vpop.f32.mrb[0].mxu0
    %714 = vmatprep.mubr.bf16.mxu0 0
    %715 = vmatmul.mubr.bf16.gmra.mrb[0].mxu0 %v658
    %v716 = vpop.f32.mrb[0].mxu0
    %v717 = vadd.f32 0.0, %v716
    %v718 = vpop.f32.mrb[0].mxu0
    %v719 = vpop.f32.mrb[0].mxu0
    %v720 = vadd.f32 0.0, %v719
    %v721 = vpop.f32.mrb[0].mxu0
    %722 = vmatprep.mubr.bf16.mxu0 0
    %723 = vmatmul.mubr.bf16.gmra.mrb[0].mxu0 %v661
    %v724 = vpop.f32.mrb[0].mxu0
    %v725 = vadd.f32 0.0, %v724
    %v726 = vpop.f32.mrb[0].mxu0
    %v727 = vpop.f32.mrb[0].mxu0
    %v728 = vadd.f32 0.0, %v727
    %v729 = vpop.f32.mrb[0].mxu0
    %730 = vmatprep.mubr.bf16.mxu0 0
    %731 = vmatmul.mubr.bf16.gmra.mrb[0].mxu0 %v664
    %v732 = vpop.f32.mrb[0].mxu0
    %v733 = vadd.f32 0.0, %v732
    %v734 = vpop.f32.mrb[0].mxu0
    %v735 = vpop.f32.mrb[0].mxu0
    %v736 = vadd.f32 0.0, %v735
    %v737 = vpop.f32.mrb[0].mxu0
    %738 = vdwg.mxu0
    %v739 = vadd.f32 %v701, %v625
    %v740 = vadd.f32 %v704, %v625
    %v741 = vadd.f32 %v709, %v625
    %v742 = vadd.f32 %v712, %v625
    %v743 = vadd.f32 %v717, %v625
    %v744 = vadd.f32 %v720, %v625
    %v745 = vadd.f32 %v725, %v625
    %v746 = vadd.f32 %v728, %v625
    %v747 = vadd.f32 %v733, %v625
    %v748 = vadd.f32 %v736, %v625
    %v749 = vld [vmem:[#allocation20] sm:$0x1]
    %v751 = vlaneseq
    %v752 = vshrl.u32 %v751, 7
    %v753 = vsub.s32 0, %v752
    %v754 = vrot.slane %v749, %v753
    %v756 = vadd.f32 %v739, %v754
    %v757 = vadd.f32 %v740, %v754
    %v758 = vadd.f32 %v741, %v754
    %v759 = vadd.f32 %v742, %v754
    %v760 = vadd.f32 %v743, %v754
    %v761 = vadd.f32 %v744, %v754
    %v762 = vadd.f32 %v745, %v754
    %v763 = vadd.f32 %v746, %v754
    %v764 = vadd.f32 %v747, %v754
    %v765 = vadd.f32 %v748, %v754
    %v766 = vtanh.pop %v756
    %v767 = vtanh.pop %v757
    %v768 = vtanh.pop %v758
    %v769 = vtanh.pop %v759
    %v770 = vtanh.pop %v760
    %v771 = vtanh.pop %v761
    %v772 = vtanh.pop %v762
    %v773 = vtanh.pop %v763
    %v774 = vtanh.pop %v764
    %v775 = vtanh.pop %v765
    %v776 = vld [vmem:[#allocation22] sm:$0x1]
    %v778 = vlaneseq
    %v779 = vshrl.u32 %v778, 7
    %v780 = vsub.s32 0, %v779
    %v781 = vrot.slane %v776, %v780
    %v783 = vmul.f32 %v766, %v781
    %v784 = vmul.f32 %v767, %v781
    %v785 = vmul.f32 %v768, %v781
    %v786 = vmul.f32 %v769, %v781
    %v787 = vmul.f32 %v770, %v781
    %v788 = vmul.f32 %v771, %v781
    %v789 = vmul.f32 %v772, %v781
    %v790 = vmul.f32 %v773, %v781
    %v791 = vmul.f32 %v774, %v781
    %v792 = vmul.f32 %v775, %v781
    %v793 = vsel %vm327, %v783, 0.0
    %794 = vadd.xlane.f32.xlu0 %v793
    %v795 = vpop.xlane.xlu0 %794
    %v796 = vsel %vm327, %v784, 0.0
    %797 = vadd.xlane.f32.xlu0 %v796
    %v798 = vpop.xlane.xlu0 %797
    %v799 = vsel %vm327, %v785, 0.0
    %800 = vadd.xlane.f32.xlu0 %v799
    %v801 = vpop.xlane.xlu0 %800
    %v802 = vsel %vm327, %v786, 0.0
    %803 = vadd.xlane.f32.xlu0 %v802
    %v804 = vpop.xlane.xlu0 %803
    %v805 = vsel %vm327, %v787, 0.0
    %806 = vadd.xlane.f32.xlu0 %v805
    %v807 = vpop.xlane.xlu0 %806
    %v808 = vsel %vm327, %v788, 0.0
    %809 = vadd.xlane.f32.xlu0 %v808
    %v810 = vpop.xlane.xlu0 %809
    %v811 = vsel %vm327, %v789, 0.0
    %812 = vadd.xlane.f32.xlu0 %v811
    %v813 = vpop.xlane.xlu0 %812
    %v814 = vsel %vm327, %v790, 0.0
    %815 = vadd.xlane.f32.xlu0 %v814
    %v816 = vpop.xlane.xlu0 %815
    %v817 = vsel %vm327, %v791, 0.0
    %818 = vadd.xlane.f32.xlu0 %v817
    %v819 = vpop.xlane.xlu0 %818
    %v820 = vsel %vm327, %v792, 0.0
    %821 = vadd.xlane.f32.xlu0 %v820
    %v822 = vpop.xlane.xlu0 %821
    %v823 = vmax.f32 %v795, %v807
    %v824 = vmax.f32 %v798, %v810
    %v825 = vmax.f32 %v801, %v813
    %v826 = vmax.f32 %v804, %v816
    %v827 = vmax.f32 %v823, %v819
    %v828 = vmax.f32 %v824, %v822
    %v829 = vmax.f32 %v827, %v828
    %v830 = vmax.f32 %v825, %v826
    %v831 = vmax.f32 %v829, %v830
    %v832 = vsub.f32 %v795, %v831
    %v833 = vsub.f32 %v798, %v831
    %v834 = vsub.f32 %v801, %v831
    %v835 = vsub.f32 %v804, %v831
    %v836 = vsub.f32 %v807, %v831
    %v837 = vsub.f32 %v810, %v831
    %v838 = vsub.f32 %v813, %v831
    %v839 = vsub.f32 %v816, %v831
    %v840 = vsub.f32 %v819, %v831
    %v841 = vsub.f32 %v822, %v831
    %v842 = vmul.f32 %v832, 1.442695
    %v843 = vpow.pop %v842
    %v844 = vmul.f32 %v833, 1.442695
    %v845 = vpow.pop %v844
    %v846 = vmul.f32 %v834, 1.442695
    %v847 = vpow.pop %v846
    %v848 = vmul.f32 %v835, 1.442695
    %v849 = vpow.pop %v848
    %v850 = vmul.f32 %v836, 1.442695
    %v851 = vpow.pop %v850
    %v852 = vmul.f32 %v837, 1.442695
    %v853 = vpow.pop %v852
    %v854 = vmul.f32 %v838, 1.442695
    %v855 = vpow.pop %v854
    %v856 = vmul.f32 %v839, 1.442695
    %v857 = vpow.pop %v856
    %v858 = vmul.f32 %v840, 1.442695
    %v859 = vpow.pop %v858
    %v860 = vmul.f32 %v841, 1.442695
    %v861 = vpow.pop %v860
    %v862 = vadd.f32 %v843, %v845
    %v863 = vadd.f32 %v862, %v847
    %v864 = vadd.f32 %v863, %v849
    %v865 = vadd.f32 %v864, %v851
    %v866 = vadd.f32 %v865, %v853
    %v867 = vadd.f32 %v866, %v855
    %v868 = vadd.f32 %v867, %v857
    %v869 = vadd.f32 %v868, %v859
    %v870 = vadd.f32 %v869, %v861
    %v871 = vrcp.pop %v870
    %v872 = vmul.f32 %v843, %v871
    %v873 = vmul.f32 %v845, %v871
    %v874 = vmul.f32 %v847, %v871
    %v875 = vmul.f32 %v849, %v871
    %v876 = vmul.f32 %v851, %v871
    %v877 = vmul.f32 %v853, %v871
    %v878 = vmul.f32 %v855, %v871
    %v879 = vmul.f32 %v857, %v871
    %v880 = vmul.f32 %v859, %v871
    %v881 = vmul.f32 %v861, %v871
    %v882 = vmul.f32 %v872, %v564
    %v883 = vmul.f32 %v873, %v565
    %v884 = vmul.f32 %v874, %v566
    %v885 = vmul.f32 %v875, %v567
    %v886 = vmul.f32 %v876, %v568
    %v887 = vmul.f32 %v877, %v569
    %v888 = vmul.f32 %v878, %v570
    %v889 = vmul.f32 %v879, %v571
    %v890 = vmul.f32 %v880, %v572
    %v891 = vmul.f32 %v881, %v573
    %v892 = vsel %vm327, %v882, 0.0
    %v893 = vsel %vm327, %v883, 0.0
    %v894 = vadd.f32 %v892, %v893
    %v895 = vsel %vm327, %v884, 0.0
    %v896 = vadd.f32 %v894, %v895
    %v897 = vsel %vm327, %v885, 0.0
    %v898 = vadd.f32 %v896, %v897
    %v899 = vsel %vm327, %v886, 0.0
    %v900 = vadd.f32 %v898, %v899
    %v901 = vsel %vm327, %v887, 0.0
    %v902 = vadd.f32 %v900, %v901
    %v903 = vsel %vm327, %v888, 0.0
    %v904 = vadd.f32 %v902, %v903
    %v905 = vsel %vm327, %v889, 0.0
    %v906 = vadd.f32 %v904, %v905
    %v907 = vsel %vm327, %v890, 0.0
    %v908 = vadd.f32 %v906, %v907
    %v909 = vsel %vm327, %v891, 0.0
    %v910 = vadd.f32 %v908, %v909
    %v911 = vld [vmem:[#allocation2] sm:$0xff]
    %v912 = vpack.c.bf16 %v911, %v911
    %v913 = vld [vmem:[#allocation23] sm:$0xf]
    %v914 = vld [vmem:[#allocation23 + $0x4] sm:$0xf]
    %v915 = vld [vmem:[#allocation23 + $0x8] sm:$0xf]
    %v916 = vld [vmem:[#allocation23 + $0xc] sm:$0xf]
    %v917 = vld [vmem:[#allocation23 + $0x10] sm:$0xf]
    %v918 = vld [vmem:[#allocation23 + $0x14] sm:$0xf]
    %v919 = vld [vmem:[#allocation23 + $0x18] sm:$0xf]
    %v920 = vld [vmem:[#allocation23 + $0x1c] sm:$0xf]
    %v921 = vld [vmem:[#allocation23 + $0x20] sm:$0xf]
    %v922 = vld [vmem:[#allocation23 + $0x24] sm:$0xf]
    %v923 = vld [vmem:[#allocation23 + $0x28] sm:$0xf]
    %v924 = vld [vmem:[#allocation23 + $0x2c] sm:$0xf]
    %v925 = vld [vmem:[#allocation23 + $0x30] sm:$0xf]
    %v926 = vpack.c.bf16 %v563, %v563
    %v927 = vld [vmem:[#allocation25] sm:$0xf]
    %v928 = vld [vmem:[#allocation25 + $0x4] sm:$0xf]
    %v929 = vld [vmem:[#allocation25 + $0x8] sm:$0xf]
    %v930 = vld [vmem:[#allocation25 + $0xc] sm:$0xf]
    %v935 = vunpack.c.l.b16 %v927
    %v936 = vunpack.c.l.b16 %v928
    %v937 = vunpack.c.l.b16 %v929
    %v938 = vunpack.c.l.b16 %v930
    %v939 = vpack.c.b16 %v936, %v935
    %v940 = vpack.c.b16 %v938, %v937
    %v944 = vsel %vm327, %v926, 0
    %946 = vmatprep.subr.bf16.mxu0 0
    %947 = vmatpush1.bf16.msra.mxu0 %v939
    %948 = vmatprep.subr.bf16.mxu0 0
    %949 = vmatpush1.bf16.msra.mxu0 %v940
    %950 = vmatprep.subr.bf16.mxu0 0
    %951 = vmatpush1.bf16.msra.mxu0 0
    %952 = vmatprep.subr.bf16.mxu0 0
    %953 = vmatpush1.bf16.msra.mxu0 0
    %954 = vmatprep.subr.bf16.mxu0 0
    %955 = vmatpush1.bf16.msra.mxu0 0
    %956 = vmatprep.subr.bf16.mxu0 0
    %957 = vmatpush1.bf16.msra.mxu0 0
    %958 = vmatprep.subr.bf16.mxu0 0
    %959 = vmatpush1.bf16.msra.mxu0 0
    %960 = vmatprep.subr.bf16.mxu0 0
    %961 = vmatpush1.bf16.msra.mxu0 0
    %962 = vmatprep.subr.bf16.mxu0 0
    %963 = vmatpush1.bf16.msra.mxu0 0
    %964 = vmatprep.subr.bf16.mxu0 0
    %965 = vmatpush1.bf16.msra.mxu0 0
    %966 = vmatprep.subr.bf16.mxu0 0
    %967 = vmatpush1.bf16.msra.mxu0 0
    %968 = vmatprep.subr.bf16.mxu0 0
    %969 = vmatpush1.bf16.msra.mxu0 0
    %970 = vmatprep.subr.bf16.mxu0 0
    %971 = vmatpush1.bf16.msra.mxu0 0
    %972 = vmatprep.subr.bf16.mxu0 0
    %973 = vmatpush1.bf16.msra.mxu0 0
    %974 = vmatprep.subr.bf16.mxu0 0
    %975 = vmatpush1.bf16.msra.mxu0 0
    %976 = vmatprep.subr.bf16.mxu0 0
    %977 = vmatpush1.bf16.msra.mxu0 0
    %978 = vmatprep.mubr.bf16.mxu0 0
    %979 = vmatmul.mubr.bf16.gmra.mrb[0].mxu0 %v944
    %v980 = vpop.f32.mrb[0].mxu0
    %v981 = vadd.f32 0.0, %v980
    %v982 = vpop.f32.mrb[0].mxu0
    %v983 = vpop.f32.mrb[0].mxu0
    %v984 = vpop.f32.mrb[0].mxu0
    %985 = vdwg.mxu0
    %v999 = vunpack.c.l.b16 %v913
    %v1000 = vunpack.c.l.b16 %v914
    %v1001 = vunpack.c.l.b16 %v915
    %v1002 = vunpack.c.l.b16 %v916
    %v1003 = vunpack.c.l.b16 %v917
    %v1004 = vunpack.c.l.b16 %v918
    %v1005 = vunpack.c.l.b16 %v919
    %v1006 = vunpack.c.l.b16 %v920
    %v1007 = vunpack.c.l.b16 %v921
    %v1008 = vunpack.c.l.b16 %v922
    %v1009 = vunpack.c.l.b16 %v923
    %v1010 = vunpack.c.l.b16 %v924
    %v1011 = vunpack.c.l.b16 %v925
    %v1012 = vpack.c.b16 %v1000, %v999
    %v1013 = vpack.c.b16 %v1002, %v1001
    %v1014 = vpack.c.b16 %v1004, %v1003
    %v1015 = vpack.c.b16 %v1006, %v1005
    %v1016 = vpack.c.b16 %v1008, %v1007
    %v1017 = vpack.c.b16 %v1010, %v1009
    %v1018 = vpack.c.b16 %v1011, %v1011
    %vm1025 = vcmask 850944
    %v1027 = vsel %vm1025, %v912, 0
    %vm1029 = vcmask 1043456
    %v1031 = vsel %vm1029, %v1018, 0
    %1033 = vmatprep.subr.bf16.mxu0 0
    %1034 = vmatpush1.bf16.msra.mxu0 %v1012
    %1035 = vmatprep.subr.bf16.mxu0 0
    %1036 = vmatpush1.bf16.msra.mxu0 %v1013
    %1037 = vmatprep.subr.bf16.mxu0 0
    %1038 = vmatpush1.bf16.msra.mxu0 %v1014
    %1039 = vmatprep.subr.bf16.mxu0 0
    %1040 = vmatpush1.bf16.msra.mxu0 %v1015
    %1041 = vmatprep.subr.bf16.mxu0 0
    %1042 = vmatpush1.bf16.msra.mxu0 %v1016
    %1043 = vmatprep.subr.bf16.mxu0 0
    %1044 = vmatpush1.bf16.msra.mxu0 %v1017
    %1045 = vmatprep.subr.bf16.mxu0 0
    %1046 = vmatpush1.bf16.msra.mxu0 %v1031
    %1047 = vmatprep.subr.bf16.mxu0 0
    %1048 = vmatpush1.bf16.msra.mxu0 0
    %1049 = vmatprep.subr.bf16.mxu0 0
    %1050 = vmatpush1.bf16.msra.mxu0 0
    %1051 = vmatprep.subr.bf16.mxu0 0
    %1052 = vmatpush1.bf16.msra.mxu0 0
    %1053 = vmatprep.subr.bf16.mxu0 0
    %1054 = vmatpush1.bf16.msra.mxu0 0
    %1055 = vmatprep.subr.bf16.mxu0 0
    %1056 = vmatpush1.bf16.msra.mxu0 0
    %1057 = vmatprep.subr.bf16.mxu0 0
    %1058 = vmatpush1.bf16.msra.mxu0 0
    %1059 = vmatprep.subr.bf16.mxu0 0
    %1060 = vmatpush1.bf16.msra.mxu0 0
    %1061 = vmatprep.subr.bf16.mxu0 0
    %1062 = vmatpush1.bf16.msra.mxu0 0
    %1063 = vmatprep.subr.bf16.mxu0 0
    %1064 = vmatpush1.bf16.msra.mxu0 0
    %1065 = vmatprep.mubr.bf16.mxu0 0
    %1066 = vmatmul.mubr.bf16.gmra.mrb[0].mxu0 %v1027
    %v1067 = vpop.f32.mrb[0].mxu0
    %v1068 = vadd.f32 %v981, %v1067
    %v1069 = vpop.f32.mrb[0].mxu0
    %v1070 = vpop.f32.mrb[0].mxu0
    %v1071 = vpop.f32.mrb[0].mxu0
    %1072 = vdwg.mxu0
    %v1073 = vpack.c.bf16 %v910, %v910
    %v1074 = vld [vmem:[#allocation26] sm:$0xf]
    %v1075 = vld [vmem:[#allocation26 + $0x4] sm:$0xf]
    %v1076 = vld [vmem:[#allocation26 + $0x8] sm:$0xf]
    %v1077 = vld [vmem:[#allocation26 + $0xc] sm:$0xf]
    %v1082 = vunpack.c.l.b16 %v1074
    %v1083 = vunpack.c.l.b16 %v1075
    %v1084 = vunpack.c.l.b16 %v1076
    %v1085 = vunpack.c.l.b16 %v1077
    %v1086 = vpack.c.b16 %v1083, %v1082
    %v1087 = vpack.c.b16 %v1085, %v1084
    %v1091 = vsel %vm327, %v1073, 0
    %1093 = vmatprep.subr.bf16.mxu0 0
    %1094 = vmatpush1.bf16.msra.mxu0 %v1086
    %1095 = vmatprep.subr.bf16.mxu0 0
    %1096 = vmatpush1.bf16.msra.mxu0 %v1087
    %1097 = vmatprep.subr.bf16.mxu0 0
    %1098 = vmatpush1.bf16.msra.mxu0 0
    %1099 = vmatprep.subr.bf16.mxu0 0
    %1100 = vmatpush1.bf16.msra.mxu0 0
    %1101 = vmatprep.subr.bf16.mxu0 0
    %1102 = vmatpush1.bf16.msra.mxu0 0
    %1103 = vmatprep.subr.bf16.mxu0 0
    %1104 = vmatpush1.bf16.msra.mxu0 0
    %1105 = vmatprep.subr.bf16.mxu0 0
    %1106 = vmatpush1.bf16.msra.mxu0 0
    %1107 = vmatprep.subr.bf16.mxu0 0
    %1108 = vmatpush1.bf16.msra.mxu0 0
    %1109 = vmatprep.subr.bf16.mxu0 0
    %1110 = vmatpush1.bf16.msra.mxu0 0
    %1111 = vmatprep.subr.bf16.mxu0 0
    %1112 = vmatpush1.bf16.msra.mxu0 0
    %1113 = vmatprep.subr.bf16.mxu0 0
    %1114 = vmatpush1.bf16.msra.mxu0 0
    %1115 = vmatprep.subr.bf16.mxu0 0
    %1116 = vmatpush1.bf16.msra.mxu0 0
    %1117 = vmatprep.subr.bf16.mxu0 0
    %1118 = vmatpush1.bf16.msra.mxu0 0
    %1119 = vmatprep.subr.bf16.mxu0 0
    %1120 = vmatpush1.bf16.msra.mxu0 0
    %1121 = vmatprep.subr.bf16.mxu0 0
    %1122 = vmatpush1.bf16.msra.mxu0 0
    %1123 = vmatprep.subr.bf16.mxu0 0
    %1124 = vmatpush1.bf16.msra.mxu0 0
    %1125 = vmatprep.mubr.bf16.mxu0 0
    %1126 = vmatmul.mubr.bf16.gmra.mrb[0].mxu0 %v1091
    %v1127 = vpop.f32.mrb[0].mxu0
    %v1128 = vadd.f32 0.0, %v1127
    %v1129 = vpop.f32.mrb[0].mxu0
    %v1130 = vpop.f32.mrb[0].mxu0
    %v1131 = vpop.f32.mrb[0].mxu0
    %1132 = vdwg.mxu0
    %v1133 = vadd.f32 %v1068, %v1128
    %v1134 = vld [vmem:[#allocation28] sm:$0x1]
    %v1136 = vlaneseq
    %v1137 = vshrl.u32 %v1136, 7
    %v1138 = vsub.s32 0, %v1137
    %v1139 = vrot.slane %v1134, %v1138
    %v1141 = vadd.f32 %v1133, %v1139
    %v1142 = vlaneseq
    %v1143 = vand.u32 %v1142, 127
    %vm1144 = vcmp.ge.s32.totalorder %v1143, 64
    %vm1145 = vcmp.lt.s32.totalorder %v1143, 96
    %vm1146 = vmand %vm1144, %vm1145
    %v1147 = vmul.f32 %v1141, 0.5
    %v1148 = vsel %vm1146, %v1141, %v1147
    %v1149 = vtanh.pop %v1148
    %v1150 = vadd.f32 %v1149, 1.0
    %v1151 = vmul.f32 %v1150, 0.5
    %v1152 = vsel %vm1146, %v1149, %v1151
    %v1153 = vld [vmem:[#allocation10] sm:$0xff]
    %1155 = vrot.lane.b32.xlu0 %v1153, 32
    %v1156 = vpop.permute.xlu0 %1155
    %v1158 = vmul.f32 %v1152, %v1156
    %1160 = vrot.lane.b32.xlu0 %v1152, 64
    %v1161 = vpop.permute.xlu0 %1160
    %v1163 = vmul.f32 %v1152, %v1161
    %1165 = vrot.lane.b32.xlu0 %v1163, 32
    %v1166 = vpop.permute.xlu0 %1165
    %v1168 = vadd.f32 %v1158, %v1166
    %v1169 = vtanh.pop %v1168
    %1171 = vrot.lane.b32.xlu0 %v1169, 64
    %v1172 = vpop.permute.xlu0 %1171
    %v1174 = vmul.f32 %v1152, %v1172
    %v1175 = vpack.c.bf16 %v1174, %v1174
    %v1176 = vld [vmem:[#allocation29] sm:$0xf]
    %v1177 = vld [vmem:[#allocation29 + $0x4] sm:$0xf]
    %v1178 = vld [vmem:[#allocation29 + $0x8] sm:$0xf]
    %v1179 = vld [vmem:[#allocation29 + $0xc] sm:$0xf]
    %v1180 = vld [vmem:[#allocation31] sm:$0x1]
    %v1182 = vlaneseq
    %v1183 = vshrl.u32 %v1182, 7
    %v1184 = vsub.s32 0, %v1183
    %v1185 = vrot.slane %v1180, %v1184
    %1188 = vrot.lane.b32.xlu0 %v1175, 32
    %v1189 = vpop.permute.xlu0 %1188
    %v1194 = vunpack.c.l.b16 %v1176
    %v1195 = vunpack.c.l.b16 %v1177
    %v1196 = vunpack.c.l.b16 %v1178
    %v1197 = vunpack.c.l.b16 %v1179
    %v1198 = vpack.c.b16 %v1195, %v1194
    %v1199 = vpack.c.b16 %v1197, %v1196
    %v1203 = vsel %vm327, %v1189, 0
    %1205 = vmatprep.subr.bf16.mxu0 0
    %1206 = vmatpush1.bf16.msra.mxu0 %v1198
    %1207 = vmatprep.subr.bf16.mxu0 0
    %1208 = vmatpush1.bf16.msra.mxu0 %v1199
    %1209 = vmatprep.subr.bf16.mxu0 0
    %1210 = vmatpush1.bf16.msra.mxu0 0
    %1211 = vmatprep.subr.bf16.mxu0 0
    %1212 = vmatpush1.bf16.msra.mxu0 0
    %1213 = vmatprep.subr.bf16.mxu0 0
    %1214 = vmatpush1.bf16.msra.mxu0 0
    %1215 = vmatprep.subr.bf16.mxu0 0
    %1216 = vmatpush1.bf16.msra.mxu0 0
    %1217 = vmatprep.subr.bf16.mxu0 0
    %1218 = vmatpush1.bf16.msra.mxu0 0
    %1219 = vmatprep.subr.bf16.mxu0 0
    %1220 = vmatpush1.bf16.msra.mxu0 0
    %1221 = vmatprep.subr.bf16.mxu0 0
    %1222 = vmatpush1.bf16.msra.mxu0 0
    %1223 = vmatprep.subr.bf16.mxu0 0
    %1224 = vmatpush1.bf16.msra.mxu0 0
    %1225 = vmatprep.subr.bf16.mxu0 0
    %1226 = vmatpush1.bf16.msra.mxu0 0
    %1227 = vmatprep.subr.bf16.mxu0 0
    %1228 = vmatpush1.bf16.msra.mxu0 0
    %1229 = vmatprep.subr.bf16.mxu0 0
    %1230 = vmatpush1.bf16.msra.mxu0 0
    %1231 = vmatprep.subr.bf16.mxu0 0
    %1232 = vmatpush1.bf16.msra.mxu0 0
    %1233 = vmatprep.subr.bf16.mxu0 0
    %1234 = vmatpush1.bf16.msra.mxu0 0
    %1235 = vmatprep.subr.bf16.mxu0 0
    %1236 = vmatpush1.bf16.msra.mxu0 0
    %1237 = vmatprep.mubr.bf16.mxu0 0
    %1238 = vmatmul.mubr.bf16.gmra.mrb[0].mxu0 %v1203
    %v1239 = vpop.f32.mrb[0].mxu0
    %v1240 = vadd.f32 %v1185, %v1239
    %v1241 = vpop.f32.mrb[0].mxu0
    %v1242 = vpop.f32.mrb[0].mxu0
    %v1243 = vpop.f32.mrb[0].mxu0
    %1244 = vdwg.mxu0
    %1245 = vst [vmem:[#allocation32] sm:$0xff] 0.0
    %1246 = vst [vmem:[#allocation32 + $0x8] sm:$0xff] 0.0
    %1247 = vst [vmem:[#allocation32 + $0x10] sm:$0xff] 0.0
    %vm1248 = vcmask 162816
    %1249 = vst.msk [vmem:[#allocation32] sm:$0xff] %vm1248, %v1240
    %1251 = vrot.lane.b32.xlu0 %v1174, 32
    %v1252 = vpop.permute.xlu0 %1251
    %1254 = vst.msk [vmem:[#allocation32 + $0x8] sm:$0xff] %vm327, %v1252
    %1256 = vrot.lane.b32.xlu0 %v1168, 96
    %v1257 = vpop.permute.xlu0 %1256
    %1259 = vst.msk [vmem:[#allocation32 + $0x10] sm:$0xff] %vm327, %v1257
    // Predicated region
    $region154: #{forward.1} parent=1 // pred_check
      _
    $region155: #{forward.1} parent=1 // pred_check_branch
      %1261 = sbr.rel (0) target = $region157
    $region156: #{forward.1} parent=1 // pred_region
      %s1263 = ssub.s32 384, 384
      %1264 = vsyncadd [#allocation4], %s1263
      %s1266 = sshll.u32 [#allocation32], 4
      %s1267 = int_to_ptr.vmem [resolvable:$true] %s1266
      %1269 = dma.vmem_to_hbm [thread:$0]  %s1267, 384, %s19, [#allocation4]
    $region157: #{forward.1} parent=1 // pred_fallthru
      _
    // Predicated region
    $region158: #{forward.1} parent=1 // pred_check
      _
    $region159: #{forward.1} parent=1 // pred_check_branch
      %1271 = sbr.rel (0) target = $region161
    $region160: #{forward.1} parent=1 // pred_region
      %1272 = dma.done [#allocation4], 384
    $region161: #{forward.1} parent=1 // pred_fallthru
      _
    %1273 = vsyncpa [#allocation3], 1
    %1274 = vsyncpa [#allocation6], 1
    %1275 = vsyncpa [#allocation9], 1
    %1276 = vsyncpa [#allocation12], 1
    %1277 = vsyncpa [#allocation15], 1
    %1278 = vsyncpa [#allocation18], 1
    %1279 = vsyncpa [#allocation21], 1
    %1280 = vsyncpa [#allocation24], 1
    %1281 = vsyncpa [#allocation27], 1
    %1282 = vsyncpa [#allocation30], 1
    %1283 = vsyncpa [#allocation4], 1

</llo_original>
